<compile_context>
chip_gen: v6e
topology: v6e:2x2x1
jax: 0.10.0
libtpu: 0.0.40
codegen_flags: <defaults>
</compile_context>

<pallas_src>
import functools

import numpy as np
import jax
import jax.numpy as jnp
from jax import lax
from jax.experimental import pallas as pl
from jax.experimental.pallas import tpu as pltpu


# ----------------------------------------------------------------------------
# Host-side constant builders (computed once, passed to the kernel as inputs).
# ----------------------------------------------------------------------------
def _interp_matrix_1d(n_in, n_out):
    """R (n_out, n_in) such that R @ v is 1-D bilinear resize, align_corners=True."""
    r = np.zeros((n_out, n_in), np.float32)
    if n_out == 1 or n_in == 1:
        r[:, 0] = 1.0
        return r
    for i in range(n_out):
        src = i * (n_in - 1) / (n_out - 1)
        i0 = min(int(np.floor(src)), n_in - 2)
        frac = src - i0
        r[i, i0] += 1.0 - frac
        r[i, i0 + 1] += frac
    return r


def _tap_masks(h2, w2):
    """(9, H2*W2) validity masks for the 3x3 conv taps (zero padding)."""
    i2 = np.arange(h2)[:, None]
    j2 = np.arange(w2)[None, :]
    m = np.zeros((9, h2 * w2), np.float32)
    for t in range(9):
        dy, dx = t // 3 - 1, t % 3 - 1
        valid = ((i2 + dy >= 0) & (i2 + dy < h2) &
                 (j2 + dx >= 0) & (j2 + dx < w2))
        m[t] = valid.astype(np.float32).reshape(-1)
    return m


# ----------------------------------------------------------------------------
# Kernel: one batch element per grid step.
# ----------------------------------------------------------------------------
def _upsample_conv_kernel(x_ref, ut_ref, kmat_ref, bias_ref, mask_ref, out_ref,
                          *, cin, w2):
    x = x_ref[0].astype(jnp.float32)                         # (Cin, H*W)

    # --- bilinear upsample (align_corners=True): one fused MXU matmul ---
    up = jnp.dot(x, ut_ref[...], preferred_element_type=jnp.float32)  # (Cin, H2*W2)

    # --- im2col rows for the 3x3 / pad=1 conv ---
    # For tap (dy, dx) the flattened source index is p + dy*W2 + dx; build it
    # with a static lane shift, then zero out-of-image positions with the
    # precomputed boundary mask.
    taps = []
    for t in range(9):
        dy, dx = t // 3 - 1, t % 3 - 1
        s = dy * w2 + dx
        if s > 0:
            shifted = jnp.concatenate(
                [up[:, s:], jnp.zeros((cin, s), jnp.float32)], axis=1)
        elif s < 0:
            shifted = jnp.concatenate(
                [jnp.zeros((cin, -s), jnp.float32), up[:, :s]], axis=1)
        else:
            shifted = up
        taps.append(shifted * mask_ref[t:t + 1, :])
    patches = jnp.concatenate(taps, axis=0)                  # (9*Cin, H2*W2)

    # --- conv: single matmul contracting all 9 taps x Cin at once ---
    out = jnp.dot(kmat_ref[...], patches,
                  preferred_element_type=jnp.float32) + bias_ref[...]
    out_ref[0] = out.astype(out_ref.dtype)                   # lane-dense store


# ----------------------------------------------------------------------------
# Wrapper
# ----------------------------------------------------------------------------
def upsample_block(x_nchw, weight, bias, *, scale=2.0):
    """x_nchw: (B, C_in, H, W); weight: (C_out, C_in, 3, 3); bias: (C_out,)."""
    b, cin, h, w = x_nchw.shape
    cout = weight.shape[0]
    h2, w2 = int(np.floor(h * scale)), int(np.floor(w * scale))
    hw, n2 = h * w, h2 * w2

    # Hoisted constants.
    rh = _interp_matrix_1d(h, h2)
    rw = _interp_matrix_1d(w, w2)
    ut = jnp.asarray(np.ascontiguousarray(np.kron(rh, rw).T))   # (H*W, H2*W2)
    masks = jnp.asarray(_tap_masks(h2, w2))                     # (9, H2*W2)
    # Kmat[co, (ky*3+kx)*Cin + c] = weight[co, c, ky, kx]
    kmat = jnp.transpose(weight, (0, 2, 3, 1)).reshape(cout, 9 * cin)
    bvec = bias.reshape(cout, 1)

    x_flat = x_nchw.reshape(b, cin, hw)

    kernel = functools.partial(_upsample_conv_kernel, cin=cin, w2=w2)

    flops = 2 * b * (cin * hw * n2 + cout * 9 * cin * n2)
    bytes_accessed = 4 * (b * cin * hw + b * cout * n2
                          + hw * n2 + 9 * n2 + cout * 9 * cin + cout)

    out_flat = pl.pallas_call(
        kernel,
        out_shape=jax.ShapeDtypeStruct((b, cout, n2), jnp.float32),
        grid=(b,),
        in_specs=[
            pl.BlockSpec((1, cin, hw), lambda i: (i, 0, 0)),    # x
            pl.BlockSpec((hw, n2), lambda i: (0, 0)),           # upsample matrix^T
            pl.BlockSpec((cout, 9 * cin), lambda i: (0, 0)),    # conv weights (im2col)
            pl.BlockSpec((cout, 1), lambda i: (0, 0)),          # conv bias
            pl.BlockSpec((9, n2), lambda i: (0, 0)),            # tap masks
        ],
        out_specs=pl.BlockSpec((1, cout, n2), lambda i: (i, 0, 0)),
        compiler_params=pltpu.CompilerParams(
            dimension_semantics=("parallel",),
            vmem_limit_bytes=64 * 1024 * 1024),
        cost_estimate=pl.CostEstimate(flops=flops, transcendentals=0,
                                      bytes_accessed=bytes_accessed),
    )(x_flat, ut, kmat, bvec, masks)

    return out_flat.reshape(b, cout, h2, w2)


# ----------------------------------------------------------------------------
# Pure-JAX reference (independent of the kernel's matrix formulation).
# ----------------------------------------------------------------------------
def reference(x, weight, bias, scale):
    b, c, h, w = x.shape
    h2, w2 = int(np.floor(h * scale)), int(np.floor(w * scale))

    def coords(n_out, n_in):
        src = jnp.arange(n_out, dtype=jnp.float32) * (n_in - 1) / (n_out - 1)
        i0 = jnp.clip(jnp.floor(src).astype(jnp.int32), 0, n_in - 2)
        frac = src - i0.astype(jnp.float32)
        return i0, frac

    yi, yf = coords(h2, h)
    xi, xf = coords(w2, w)
    rows = (x[:, :, yi, :] * (1.0 - yf)[None, None, :, None]
            + x[:, :, yi + 1, :] * yf[None, None, :, None])       # (B, C, H2, W)
    up = rows[:, :, :, xi] * (1.0 - xf) + rows[:, :, :, xi + 1] * xf  # (B, C, H2, W2)

    out = lax.conv_general_dilated(
        up, weight, window_strides=(1, 1), padding=((1, 1), (1, 1)),
        dimension_numbers=("NCHW", "OIHW", "NCHW"),
        precision=lax.Precision.HIGHEST)
    return out + bias.reshape(1, -1, 1, 1)


if __name__ == "__main__":
    B, C_IN, C_OUT, H, W = 2, 4, 8, 16, 16
    SCALE = 2.0

    key = jax.random.PRNGKey(0)
    kx, kw, kb = jax.random.split(key, 3)
    x = jax.random.normal(kx, (B, C_IN, H, W), jnp.float32)
    # Stand-ins for nn.Conv2d weight/bias (torch layout: (C_out, C_in, 3, 3)).
    weight = jax.random.normal(kw, (C_OUT, C_IN, 3, 3), jnp.float32) * 0.1
    bias = jax.random.normal(kb, (C_OUT,), jnp.float32) * 0.1

    out = upsample_block(x, weight, bias, scale=SCALE)
    out = jax.block_until_ready(out)

    ref = reference(x, weight, bias, SCALE)
    assert out.shape == (B, C_OUT, 2 * H, 2 * W), out.shape
    max_err = float(jnp.max(jnp.abs(out - ref)))
    assert jnp.allclose(out, ref, atol=2e-3, rtol=2e-3), max_err

    print("KERNEL_OK")
</pallas_src>

<mosaic_0001>
module attributes {stable_mosaic.version = 11 : i64} {
  func.func @_upsample_conv_kernel(%arg0: i32, %arg1: memref<1x4x256xf32, #tpu.memory_space<vmem>>, %arg2: memref<256x1024xf32, #tpu.memory_space<vmem>>, %arg3: memref<8x36xf32, #tpu.memory_space<vmem>>, %arg4: memref<8x1xf32, #tpu.memory_space<vmem>>, %arg5: memref<9x1024xf32, #tpu.memory_space<vmem>>, %arg6: memref<1x8x1024xf32, #tpu.memory_space<vmem>>) attributes {dimension_semantics = [#tpu.dimension_semantics<parallel>], iteration_bounds = array<i64: 2>, scalar_prefetch = 0 : i64, scratch_operands = 0 : i64, tpu.core_type = #tpu.core_type<tc>, window_params = [{transform_indices = @transform_0, window_bounds = array<i64: 1, 4, 256>}, {pipeline_mode = #tpu.pipeline_mode<synchronous>, transform_indices = @transform_1, window_bounds = array<i64: 256, 1024>}, {pipeline_mode = #tpu.pipeline_mode<synchronous>, transform_indices = @transform_2, window_bounds = array<i64: 8, 36>}, {pipeline_mode = #tpu.pipeline_mode<synchronous>, transform_indices = @transform_3, window_bounds = array<i64: 8, 1>}, {pipeline_mode = #tpu.pipeline_mode<synchronous>, transform_indices = @transform_4, window_bounds = array<i64: 9, 1024>}, {transform_indices = @transform_5, window_bounds = array<i64: 1, 8, 1024>}]} {
    %c0 = arith.constant 0 : index
    %c0_0 = arith.constant 0 : index
    %c0_1 = arith.constant 0 : index
    %0 = vector.load %arg1[%c0, %c0_0, %c0_1] : memref<1x4x256xf32, #tpu.memory_space<vmem>>, vector<1x4x256xf32>
    %1 = vector.shape_cast %0 : vector<1x4x256xf32> to vector<4x256xf32>
    %c0_2 = arith.constant 0 : index
    %c0_3 = arith.constant 0 : index
    %2 = vector.load %arg2[%c0_2, %c0_3] : memref<256x1024xf32, #tpu.memory_space<vmem>>, vector<256x1024xf32>
    %cst = arith.constant dense<0.000000e+00> : vector<4x1024xf32>
    %3 = tpu.matmul %1, %2, %cst {dimension_numbers = #tpu.dot_dimension_numbers<[1], [0], [0], [1], [0, 0, 1, 1], [], []>} : vector<4x256xf32>, vector<256x1024xf32>, vector<4x1024xf32> -> vector<4x1024xf32>
    %cst_4 = arith.constant 0.000000e+00 : f32
    %4 = vector.broadcast %cst_4 : f32 to vector<4x33xf32>
    %5 = vector.extract_strided_slice %3 {offsets = [0, 0], sizes = [4, 991], strides = [1, 1]} : vector<4x1024xf32> to vector<4x991xf32>
    %6 = tpu.concatenate %4, %5 in 1 : vector<4x33xf32>, vector<4x991xf32> -> vector<4x1024xf32>
    %c0_5 = arith.constant 0 : index
    %c0_6 = arith.constant 0 : index
    %7 = vector.load %arg5[%c0_5, %c0_6] : memref<9x1024xf32, #tpu.memory_space<vmem>>, vector<1x1024xf32>
    %8 = vector.broadcast %7 : vector<1x1024xf32> to vector<4x1024xf32>
    %9 = arith.mulf %6, %8 : vector<4x1024xf32>
    %cst_7 = arith.constant 0.000000e+00 : f32
    %10 = vector.broadcast %cst_7 : f32 to vector<4x32xf32>
    %11 = vector.extract_strided_slice %3 {offsets = [0, 0], sizes = [4, 992], strides = [1, 1]} : vector<4x1024xf32> to vector<4x992xf32>
    %12 = tpu.concatenate %10, %11 in 1 : vector<4x32xf32>, vector<4x992xf32> -> vector<4x1024xf32>
    %c1 = arith.constant 1 : index
    %c0_8 = arith.constant 0 : index
    %13 = vector.load %arg5[%c1, %c0_8] : memref<9x1024xf32, #tpu.memory_space<vmem>>, vector<1x1024xf32>
    %14 = vector.broadcast %13 : vector<1x1024xf32> to vector<4x1024xf32>
    %15 = arith.mulf %12, %14 : vector<4x1024xf32>
    %cst_9 = arith.constant 0.000000e+00 : f32
    %16 = vector.broadcast %cst_9 : f32 to vector<4x31xf32>
    %17 = vector.extract_strided_slice %3 {offsets = [0, 0], sizes = [4, 993], strides = [1, 1]} : vector<4x1024xf32> to vector<4x993xf32>
    %18 = tpu.concatenate %16, %17 in 1 : vector<4x31xf32>, vector<4x993xf32> -> vector<4x1024xf32>
    %c2 = arith.constant 2 : index
    %c0_10 = arith.constant 0 : index
    %19 = vector.load %arg5[%c2, %c0_10] : memref<9x1024xf32, #tpu.memory_space<vmem>>, vector<1x1024xf32>
    %20 = vector.broadcast %19 : vector<1x1024xf32> to vector<4x1024xf32>
    %21 = arith.mulf %18, %20 : vector<4x1024xf32>
    %cst_11 = arith.constant 0.000000e+00 : f32
    %22 = vector.broadcast %cst_11 : f32 to vector<4x1xf32>
    %23 = vector.extract_strided_slice %3 {offsets = [0, 0], sizes = [4, 1023], strides = [1, 1]} : vector<4x1024xf32> to vector<4x1023xf32>
    %24 = tpu.concatenate %22, %23 in 1 : vector<4x1xf32>, vector<4x1023xf32> -> vector<4x1024xf32>
    %c3 = arith.constant 3 : index
    %c0_12 = arith.constant 0 : index
    %25 = vector.load %arg5[%c3, %c0_12] : memref<9x1024xf32, #tpu.memory_space<vmem>>, vector<1x1024xf32>
    %26 = vector.broadcast %25 : vector<1x1024xf32> to vector<4x1024xf32>
    %27 = arith.mulf %24, %26 : vector<4x1024xf32>
    %c4 = arith.constant 4 : index
    %c0_13 = arith.constant 0 : index
    %28 = vector.load %arg5[%c4, %c0_13] : memref<9x1024xf32, #tpu.memory_space<vmem>>, vector<1x1024xf32>
    %29 = vector.broadcast %28 : vector<1x1024xf32> to vector<4x1024xf32>
    %30 = arith.mulf %3, %29 : vector<4x1024xf32>
    %31 = vector.extract_strided_slice %3 {offsets = [0, 1], sizes = [4, 1023], strides = [1, 1]} : vector<4x1024xf32> to vector<4x1023xf32>
    %cst_14 = arith.constant 0.000000e+00 : f32
    %32 = vector.broadcast %cst_14 : f32 to vector<4x1xf32>
    %33 = tpu.concatenate %31, %32 in 1 : vector<4x1023xf32>, vector<4x1xf32> -> vector<4x1024xf32>
    %c5 = arith.constant 5 : index
    %c0_15 = arith.constant 0 : index
    %34 = vector.load %arg5[%c5, %c0_15] : memref<9x1024xf32, #tpu.memory_space<vmem>>, vector<1x1024xf32>
    %35 = vector.broadcast %34 : vector<1x1024xf32> to vector<4x1024xf32>
    %36 = arith.mulf %33, %35 : vector<4x1024xf32>
    %37 = vector.extract_strided_slice %3 {offsets = [0, 31], sizes = [4, 993], strides = [1, 1]} : vector<4x1024xf32> to vector<4x993xf32>
    %cst_16 = arith.constant 0.000000e+00 : f32
    %38 = vector.broadcast %cst_16 : f32 to vector<4x31xf32>
    %39 = tpu.concatenate %37, %38 in 1 : vector<4x993xf32>, vector<4x31xf32> -> vector<4x1024xf32>
    %c6 = arith.constant 6 : index
    %c0_17 = arith.constant 0 : index
    %40 = vector.load %arg5[%c6, %c0_17] : memref<9x1024xf32, #tpu.memory_space<vmem>>, vector<1x1024xf32>
    %41 = vector.broadcast %40 : vector<1x1024xf32> to vector<4x1024xf32>
    %42 = arith.mulf %39, %41 : vector<4x1024xf32>
    %43 = vector.extract_strided_slice %3 {offsets = [0, 32], sizes = [4, 992], strides = [1, 1]} : vector<4x1024xf32> to vector<4x992xf32>
    %cst_18 = arith.constant 0.000000e+00 : f32
    %44 = vector.broadcast %cst_18 : f32 to vector<4x32xf32>
    %45 = tpu.concatenate %43, %44 in 1 : vector<4x992xf32>, vector<4x32xf32> -> vector<4x1024xf32>
    %c7 = arith.constant 7 : index
    %c0_19 = arith.constant 0 : index
    %46 = vector.load %arg5[%c7, %c0_19] : memref<9x1024xf32, #tpu.memory_space<vmem>>, vector<1x1024xf32>
    %47 = vector.broadcast %46 : vector<1x1024xf32> to vector<4x1024xf32>
    %48 = arith.mulf %45, %47 : vector<4x1024xf32>
    %49 = vector.extract_strided_slice %3 {offsets = [0, 33], sizes = [4, 991], strides = [1, 1]} : vector<4x1024xf32> to vector<4x991xf32>
    %cst_20 = arith.constant 0.000000e+00 : f32
    %50 = vector.broadcast %cst_20 : f32 to vector<4x33xf32>
    %51 = tpu.concatenate %49, %50 in 1 : vector<4x991xf32>, vector<4x33xf32> -> vector<4x1024xf32>
    %c8 = arith.constant 8 : index
    %c0_21 = arith.constant 0 : index
    %52 = vector.load %arg5[%c8, %c0_21] : memref<9x1024xf32, #tpu.memory_space<vmem>>, vector<1x1024xf32>
    %53 = vector.broadcast %52 : vector<1x1024xf32> to vector<4x1024xf32>
    %54 = arith.mulf %51, %53 : vector<4x1024xf32>
    %55 = tpu.concatenate %9, %15, %21, %27, %30, %36, %42, %48, %54 in 0 : vector<4x1024xf32>, vector<4x1024xf32>, vector<4x1024xf32>, vector<4x1024xf32>, vector<4x1024xf32>, vector<4x1024xf32>, vector<4x1024xf32>, vector<4x1024xf32>, vector<4x1024xf32> -> vector<36x1024xf32>
    %c0_22 = arith.constant 0 : index
    %c0_23 = arith.constant 0 : index
    %56 = vector.load %arg3[%c0_22, %c0_23] : memref<8x36xf32, #tpu.memory_space<vmem>>, vector<8x36xf32>
    %cst_24 = arith.constant dense<0.000000e+00> : vector<8x1024xf32>
    %57 = tpu.matmul %56, %55, %cst_24 {dimension_numbers = #tpu.dot_dimension_numbers<[1], [0], [0], [1], [0, 0, 1, 1], [], []>} : vector<8x36xf32>, vector<36x1024xf32>, vector<8x1024xf32> -> vector<8x1024xf32>
    %c0_25 = arith.constant 0 : index
    %c0_26 = arith.constant 0 : index
    %58 = vector.load %arg4[%c0_25, %c0_26] : memref<8x1xf32, #tpu.memory_space<vmem>>, vector<8x1xf32>
    %59 = vector.broadcast %58 : vector<8x1xf32> to vector<8x1024xf32>
    %60 = arith.addf %57, %59 : vector<8x1024xf32>
    %c0_27 = arith.constant 0 : index
    %c0_28 = arith.constant 0 : index
    %c0_29 = arith.constant 0 : index
    %61 = vector.load %arg6[%c0_27, %c0_28, %c0_29] : memref<1x8x1024xf32, #tpu.memory_space<vmem>>, vector<1x8x1024xf32>
    %62 = vector.shape_cast %61 : vector<1x8x1024xf32> to vector<8x1024xf32>
    %63 = vector.shape_cast %60 : vector<8x1024xf32> to vector<1x8x1024xf32>
    tpu.vector_store %arg6[%c0_27, %c0_28, %c0_29], %63 {strides = array<i32>} : memref<1x8x1024xf32, #tpu.memory_space<vmem>>, vector<1x8x1024xf32>,
    return
  }
  func.func @transform_0(%arg0: i32) -> (i32, i32, i32) {
    %c0_i32 = arith.constant 0 : i32
    %c0_i32_0 = arith.constant 0 : i32
    %c0_i32_1 = arith.constant 0 : i32
    return %arg0, %c0_i32, %c0_i32_0 : i32, i32, i32
  }
  func.func @transform_1(%arg0: i32) -> (i32, i32) {
    %c0_i32 = arith.constant 0 : i32
    %c0_i32_0 = arith.constant 0 : i32
    %c0_i32_1 = arith.constant 0 : i32
    return %c0_i32, %c0_i32_0 : i32, i32
  }
  func.func @transform_2(%arg0: i32) -> (i32, i32) {
    %c0_i32 = arith.constant 0 : i32
    %c0_i32_0 = arith.constant 0 : i32
    %c0_i32_1 = arith.constant 0 : i32
    return %c0_i32, %c0_i32_0 : i32, i32
  }
  func.func @transform_3(%arg0: i32) -> (i32, i32) {
    %c0_i32 = arith.constant 0 : i32
    %c0_i32_0 = arith.constant 0 : i32
    %c0_i32_1 = arith.constant 0 : i32
    return %c0_i32, %c0_i32_0 : i32, i32
  }
  func.func @transform_4(%arg0: i32) -> (i32, i32) {
    %c0_i32 = arith.constant 0 : i32
    %c0_i32_0 = arith.constant 0 : i32
    %c0_i32_1 = arith.constant 0 : i32
    return %c0_i32, %c0_i32_0 : i32, i32
  }
  func.func @transform_5(%arg0: i32) -> (i32, i32, i32) {
    %c0_i32 = arith.constant 0 : i32
    %c0_i32_0 = arith.constant 0 : i32
    %c0_i32_1 = arith.constant 0 : i32
    return %arg0, %c0_i32, %c0_i32_0 : i32, i32, i32
  }
}

</mosaic_0001>

<llo_original>
// kernel: tpu_custom_call.1
$region0: #{tpu_custom_call.1}
  #allocation0 [shape = 'u32[]', space=smem, size = 0x4, offset = 0x4, fixed_abs, tag = 'smem constant byte address 0x4 - core index']
  #allocation1 [shape = 'u32[144,128]{1,0:T(1,128)}', space=vmem, size = 0x12000, scoped, tag = 'internal scratch']
  %s0 = inlined_call_operand.hbm [shape: f32[2,4,256], index: 0, kind: input, shape index: {}]
  %s1 = inlined_call_operand.hbm [shape: f32[256,1024], index: 1, kind: input, shape index: {}]
  %s2 = inlined_call_operand.vmem [shape: f32[8,36], index: 2, kind: input, shape index: {}]
  %s3 = inlined_call_operand.vmem [shape: f32[8,1], index: 3, kind: input, shape index: {}]
  %s4 = inlined_call_operand.hbm [shape: f32[9,1024], index: 4, kind: input, shape index: {}]
  %s5 = inlined_call_operand.hbm [shape: f32[2,8,1024], index: 5, kind: output, shape index: {}]
  %s6 = sld [smem:[#allocation0]]
  $region65: #{tpu_custom_call.1} parent=0
    _
  %s8 = ssub.s32 1, %s6
  %s9 = scalar_select 0, %s8, %s6
  $region1: #{tpu_custom_call.1} parent=0
    #allocation2 [shape = 'u8[8192]{0}', space=vmem, size = 0x2000, scoped, tag = 'input window, operand 0']
    #allocation3 [shape = 's32[2]{0}', space=sflag, size = 0x8, scoped, tag = 'scoped memory for tpu_custom_call.1']
    #allocation4 [shape = 's32[2]{0}', space=sflag, size = 0x8, scoped, tag = 'scoped memory for tpu_custom_call.1']
    #allocation5 [shape = 'u8[1048576]{0}', space=vmem, size = 0x100000, scoped, tag = 'input window, operand 1, single buffered']
    #allocation6 [shape = 's32[1]{0}', space=sflag, size = 0x4, scoped, tag = 'scoped memory for tpu_custom_call.1']
    #allocation7 [shape = 'u8[65536]{0}', space=vmem, size = 0x10000, scoped, tag = 'input window, operand 4, single buffered']
    #allocation8 [shape = 'u8[65536]{0}', space=vmem, size = 0x10000, scoped, tag = 'output window, operand 0']
    %10 = vsyncpa [#allocation3], 0
    %s11 = scalar_lea.sflag [#allocation3], 1
    %12 = vsyncpa %s11, 0
    %13 = vsyncpa [#allocation6], 0
    %14 = vsyncpa [#allocation4], 0
    %s15 = scalar_lea.sflag [#allocation4], 1
    %16 = vsyncpa %s15, 0
    loop: start=0, step=1, limit=4
    $region2: #{tpu_custom_call.1} parent=1 // loop_pre_header
      _
    $region3: #{tpu_custom_call.1} parent=1 // loop_header
      %s18 = sphi 0, %s22
      %p19 = scmp.ge.s32.totalorder %s18, 4
      %s28 = sphi 0, %s30
      %s31 = sphi 0, %s28
      %s32 = sphi 0, %s31
      %s48 = sphi 0, %s32
      %s52 = sphi 0, %s52
      %s54 = sphi 0, %s52
      %s55 = sphi 0, %s54
      %s69 = sphi 0, %s55
      %s73 = sphi 0, %s73
      %s75 = sphi 0, %s73
      %s76 = sphi 0, %s75
      %s90 = sphi 0, %s76
      %s94 = sphi 0, %s94
      %s96 = sphi 0, %s94
      %s97 = sphi 0, %s96
      %s111 = sphi 0, %s97
      %s115 = sphi 0, %s115
      %s117 = sphi 0, %s115
      %s118 = sphi 0, %s117
      %s132 = sphi 0, %s118
      %s138 = sphi 0, %s140
      %s141 = sphi 0, %s138
      %s142 = sphi 0, %s141
      %s158 = sphi 0, %s142
    $region4: #{tpu_custom_call.1} parent=1 // loop_header_branch
      %21 = sbr.rel (%p19) target = $region8
    $region5: #{tpu_custom_call.1} parent=1 // loop_body
      %s23 = ssub.s32 %s18, 1
      %s24 = ssub.s32 %s18, 2
      %s25 = sadd.s32 %s18, 1
      %s26 = ssub.s32 %s18, %s25
      %p27 = scmp.eq.s32.totalorder %s26, 0
      %s29 = sadd.s32 %s28, 1
      %s30 = scalar_select %p27, %s28, %s29
      %p33 = pneg %p27
      %p34 = scmp.eq.s32.totalorder %s18, 1
      %p35 = por %p33, %p34
      %p36 = scmp.ne.s32.totalorder %s28, %s31
      %p37 = scmp.eq.s32.totalorder %s18, 0
      %p38 = por %p36, %p37
      %p39 = scmp.ne.s32.totalorder %s28, %s31
      %p40 = scmp.eq.s32.totalorder %s23, 1
      %p41 = por %p39, %p40
      %p42 = scmp.ne.s32.totalorder %s31, %s32
      %p43 = scmp.eq.s32.totalorder %s23, 0
      %p44 = por %p42, %p43
      %p45 = scmp.ne.s32.totalorder %s31, %s32
      %p46 = scmp.eq.s32.totalorder %s24, 1
      %p47 = por %p45, %p46
      %p49 = scmp.ne.s32.totalorder %s32, %s48
      %p50 = scmp.eq.s32.totalorder %s24, 0
      %p51 = por %p49, %p50
      %s53 = sadd.s32 %s52, 1
      %p56 = scmp.eq.s32.totalorder %s18, 1
      %p57 = scmp.ne.s32.totalorder %s52, %s54
      %p58 = scmp.eq.s32.totalorder %s18, 0
      %p59 = por %p57, %p58
      %p60 = scmp.ne.s32.totalorder %s52, %s54
      %p61 = scmp.eq.s32.totalorder %s23, 1
      %p62 = por %p60, %p61
      %p63 = scmp.ne.s32.totalorder %s54, %s55
      %p64 = scmp.eq.s32.totalorder %s23, 0
      %p65 = por %p63, %p64
      %p66 = scmp.ne.s32.totalorder %s54, %s55
      %p67 = scmp.eq.s32.totalorder %s24, 1
      %p68 = por %p66, %p67
      %p70 = scmp.ne.s32.totalorder %s55, %s69
      %p71 = scmp.eq.s32.totalorder %s24, 0
      %p72 = por %p70, %p71
      %s74 = sadd.s32 %s73, 1
      %p77 = scmp.eq.s32.totalorder %s18, 1
      %p78 = scmp.ne.s32.totalorder %s73, %s75
      %p79 = scmp.eq.s32.totalorder %s18, 0
      %p80 = por %p78, %p79
      %p81 = scmp.ne.s32.totalorder %s73, %s75
      %p82 = scmp.eq.s32.totalorder %s23, 1
      %p83 = por %p81, %p82
      %p84 = scmp.ne.s32.totalorder %s75, %s76
      %p85 = scmp.eq.s32.totalorder %s23, 0
      %p86 = por %p84, %p85
      %p87 = scmp.ne.s32.totalorder %s75, %s76
      %p88 = scmp.eq.s32.totalorder %s24, 1
      %p89 = por %p87, %p88
      %p91 = scmp.ne.s32.totalorder %s76, %s90
      %p92 = scmp.eq.s32.totalorder %s24, 0
      %p93 = por %p91, %p92
      %s95 = sadd.s32 %s94, 1
      %p98 = scmp.eq.s32.totalorder %s18, 1
      %p99 = scmp.ne.s32.totalorder %s94, %s96
      %p100 = scmp.eq.s32.totalorder %s18, 0
      %p101 = por %p99, %p100
      %p102 = scmp.ne.s32.totalorder %s94, %s96
      %p103 = scmp.eq.s32.totalorder %s23, 1
      %p104 = por %p102, %p103
      %p105 = scmp.ne.s32.totalorder %s96, %s97
      %p106 = scmp.eq.s32.totalorder %s23, 0
      %p107 = por %p105, %p106
      %p108 = scmp.ne.s32.totalorder %s96, %s97
      %p109 = scmp.eq.s32.totalorder %s24, 1
      %p110 = por %p108, %p109
      %p112 = scmp.ne.s32.totalorder %s97, %s111
      %p113 = scmp.eq.s32.totalorder %s24, 0
      %p114 = por %p112, %p113
      %s116 = sadd.s32 %s115, 1
      %p119 = scmp.eq.s32.totalorder %s18, 1
      %p120 = scmp.ne.s32.totalorder %s115, %s117
      %p121 = scmp.eq.s32.totalorder %s18, 0
      %p122 = por %p120, %p121
      %p123 = scmp.ne.s32.totalorder %s115, %s117
      %p124 = scmp.eq.s32.totalorder %s23, 1
      %p125 = por %p123, %p124
      %p126 = scmp.ne.s32.totalorder %s117, %s118
      %p127 = scmp.eq.s32.totalorder %s23, 0
      %p128 = por %p126, %p127
      %p129 = scmp.ne.s32.totalorder %s117, %s118
      %p130 = scmp.eq.s32.totalorder %s24, 1
      %p131 = por %p129, %p130
      %p133 = scmp.ne.s32.totalorder %s118, %s132
      %p134 = scmp.eq.s32.totalorder %s24, 0
      %p135 = por %p133, %p134
      %s136 = ssub.s32 %s18, %s25
      %p137 = scmp.eq.s32.totalorder %s136, 0
      %s139 = sadd.s32 %s138, 1
      %s140 = scalar_select %p137, %s138, %s139
      %p143 = pneg %p137
      %p144 = scmp.eq.s32.totalorder %s18, 1
      %p145 = por %p143, %p144
      %p146 = scmp.ne.s32.totalorder %s138, %s141
      %p147 = scmp.eq.s32.totalorder %s18, 0
      %p148 = por %p146, %p147
      %p149 = scmp.ne.s32.totalorder %s138, %s141
      %p150 = scmp.eq.s32.totalorder %s23, 1
      %p151 = por %p149, %p150
      %p152 = scmp.ne.s32.totalorder %s141, %s142
      %p153 = scmp.eq.s32.totalorder %s23, 0
      %p154 = por %p152, %p153
      %p155 = scmp.ne.s32.totalorder %s141, %s142
      %p156 = scmp.eq.s32.totalorder %s24, 1
      %p157 = por %p155, %p156
      %p159 = scmp.ne.s32.totalorder %s142, %s158
      %p160 = scmp.eq.s32.totalorder %s24, 0
      %p161 = por %p159, %p160
      %p162 = scmp.le.s32.totalorder 1, %s18
      %p163 = scmp.lt.s32.totalorder %s18, 3
      %p164 = pnand %p162, %p163
      %p165 = pneg %p164
      // Predicated region
      $region9: #{tpu_custom_call.1} parent=5 // pred_check
        _
      $region10: #{tpu_custom_call.1} parent=5 // pred_check_branch
        %167 = sbr.rel (%p164) target = $region12
      $region11: #{tpu_custom_call.1} parent=5 // pred_region
        %s168 = ssub.s32 %s18, 1
        // Predicated region
        $region13: #{tpu_custom_call.1} parent=11 // pred_check
          %p169 = pneg %p65
        $region14: #{tpu_custom_call.1} parent=11 // pred_check_branch
          %171 = sbr.rel (%p169) target = $region16
        $region15: #{tpu_custom_call.1} parent=11 // pred_region
          %s173 = ssub.s32 32768, 32768
          %174 = vsyncadd [#allocation6], %s173
          %s175 = sshll.u32 [#allocation5], 4
          %s176 = int_to_ptr.vmem [resolvable:$true] %s175
          %181 = dma.hbm_to_vmem [thread:$0]  %s1, 32768, %s176, [#allocation6], 1024, 1024, 64
        $region16: #{tpu_custom_call.1} parent=11 // pred_fallthru
          _
        // Predicated region
        $region17: #{tpu_custom_call.1} parent=11 // pred_check
          %p182 = pneg %p86
        $region18: #{tpu_custom_call.1} parent=11 // pred_check_branch
          %184 = sbr.rel (%p182) target = $region20
        $region19: #{tpu_custom_call.1} parent=11 // pred_region
          _
        $region20: #{tpu_custom_call.1} parent=11 // pred_fallthru
          _
        // Predicated region
        $region21: #{tpu_custom_call.1} parent=11 // pred_check
          %p185 = pneg %p107
        $region22: #{tpu_custom_call.1} parent=11 // pred_check_branch
          %187 = sbr.rel (%p185) target = $region24
        $region23: #{tpu_custom_call.1} parent=11 // pred_region
          _
        $region24: #{tpu_custom_call.1} parent=11 // pred_fallthru
          _
        // Predicated region
        $region25: #{tpu_custom_call.1} parent=11 // pred_check
          %p188 = pneg %p128
        $region26: #{tpu_custom_call.1} parent=11 // pred_check_branch
          %190 = sbr.rel (%p188) target = $region28
        $region27: #{tpu_custom_call.1} parent=11 // pred_region
          %s192 = ssub.s32 2048, 2048
          %193 = vsyncadd [#allocation6], %s192
          %s194 = sshll.u32 [#allocation7], 4
          %s195 = int_to_ptr.vmem [resolvable:$true] %s194
          %200 = dma.hbm_to_vmem [thread:$0]  %s4, 2048, %s195, [#allocation6], 1024, 1024, 64
        $region28: #{tpu_custom_call.1} parent=11 // pred_fallthru
          _
      $region12: #{tpu_custom_call.1} parent=5 // pred_fallthru
        _
      %p201 = scmp.lt.s32.totalorder %s18, 2
      // Predicated region
      $region29: #{tpu_custom_call.1} parent=5 // pred_check
        %p202 = pneg %p201
      $region30: #{tpu_custom_call.1} parent=5 // pred_check_branch
        %204 = sbr.rel (%p202) target = $region32
      $region31: #{tpu_custom_call.1} parent=5 // pred_region
        // Predicated region
        $region33: #{tpu_custom_call.1} parent=31 // pred_check
          %p205 = pneg %p38
        $region34: #{tpu_custom_call.1} parent=31 // pred_check_branch
          %207 = sbr.rel (%p205) target = $region36
        $region35: #{tpu_custom_call.1} parent=31 // pred_region
          %s208 = sand.u32 %s28, 1
          %s209 = scalar_lea.sflag [#allocation3], %s208
          %s210 = sand.u32 %s28, 1
          %s211 = smul.addr %s210, 8
          %s212 = scalar_lea.vmem [#allocation2], %s211
          %s214 = ssub.s32 128, 128
          %215 = vsyncadd %s209, %s214
          %s216 = smul.addr %s18, 2
          %s217 = smul.addr %s216, 64
          %s218 = scalar_lea.hbm %s0, %s217
          %s220 = sshll.u32 %s212, 4
          %s221 = int_to_ptr.vmem [resolvable:$true] %s220
          %223 = dma.hbm_to_vmem [thread:$0]  %s218, 128, %s221, %s209
        $region36: #{tpu_custom_call.1} parent=31 // pred_fallthru
          _
      $region32: #{tpu_custom_call.1} parent=5 // pred_fallthru
        _
      %p224 = scmp.le.s32.totalorder 1, %s18
      %p225 = scmp.lt.s32.totalorder %s18, 3
      %p226 = pnand %p224, %p225
      %p227 = pneg %p226
      // Predicated region
      $region37: #{tpu_custom_call.1} parent=5 // pred_check
        _
      $region38: #{tpu_custom_call.1} parent=5 // pred_check_branch
        %229 = sbr.rel (%p226) target = $region40
      $region39: #{tpu_custom_call.1} parent=5 // pred_region
        %s230 = ssub.s32 %s18, 1
        %s231 = sand.u32 %s31, 1
        %s232 = scalar_lea.sflag [#allocation3], %s231
        %s233 = sand.u32 %s31, 1
        %s234 = smul.addr %s233, 8
        %s235 = scalar_lea.vmem [#allocation2], %s234
        // Predicated region
        $region41: #{tpu_custom_call.1} parent=39 // pred_check
          %p236 = pneg %p44
        $region42: #{tpu_custom_call.1} parent=39 // pred_check_branch
          %238 = sbr.rel (%p236) target = $region44
        $region43: #{tpu_custom_call.1} parent=39 // pred_region
          %239 = dma.done %s232, 128
        $region44: #{tpu_custom_call.1} parent=39 // pred_fallthru
          _
        // Predicated region
        $region45: #{tpu_custom_call.1} parent=39 // pred_check
          %p240 = pneg %p65
        $region46: #{tpu_custom_call.1} parent=39 // pred_check_branch
          %242 = sbr.rel (%p240) target = $region48
        $region47: #{tpu_custom_call.1} parent=39 // pred_region
          %243 = dma.done [#allocation6], 32768
        $region48: #{tpu_custom_call.1} parent=39 // pred_fallthru
          _
        // Predicated region
        $region49: #{tpu_custom_call.1} parent=39 // pred_check
          %p244 = pneg %p128
        $region50: #{tpu_custom_call.1} parent=39 // pred_check_branch
          %246 = sbr.rel (%p244) target = $region52
        $region51: #{tpu_custom_call.1} parent=39 // pred_region
          %247 = dma.done [#allocation6], 2048
        $region52: #{tpu_custom_call.1} parent=39 // pred_fallthru
          _
        %s248 = sand.u32 %s31, 1
        %s249 = scalar_lea.sflag [#allocation3], %s248
        %s250 = sand.u32 %s31, 1
        %s251 = smul.addr %s250, 8
        %s252 = scalar_lea.vmem [#allocation2], %s251
        %p253 = pneg %p44
        %p254 = pneg %p41
        %p255 = pneg %p65
        %p256 = pneg %p62
        %p257 = pneg %p86
        %p258 = pneg %p83
        %p259 = pneg %p107
        %p260 = pneg %p104
        %p261 = pneg %p128
        %p262 = pneg %p125
        %p263 = pneg %p154
        %p264 = pneg %p151
        %s265 = sand.u32 %s141, 1
        %s266 = scalar_lea.sflag [#allocation4], %s265
        %s267 = sand.u32 %s141, 1
        %s268 = smul.addr %s267, 64
        %s269 = scalar_lea.vmem [#allocation8], %s268
        %v270 = vld [vmem:[%s235] sm:$0xff]
        %v271 = vld [vmem:[#allocation5] sm:$0xff]
        %v272 = vld [vmem:[#allocation5 + $0x8] sm:$0xff]
        %v273 = vld [vmem:[#allocation5 + $0x10] sm:$0xff]
        %v274 = vld [vmem:[#allocation5 + $0x18] sm:$0xff]
        %v275 = vld [vmem:[#allocation5 + $0x20] sm:$0xff]
        %v276 = vld [vmem:[#allocation5 + $0x28] sm:$0xff]
        %v277 = vld [vmem:[#allocation5 + $0x30] sm:$0xff]
        %v278 = vld [vmem:[#allocation5 + $0x38] sm:$0xff]
        %v279 = vld [vmem:[#allocation5 + $0x40] sm:$0xff]
        %v280 = vld [vmem:[#allocation5 + $0x48] sm:$0xff]
        %v281 = vld [vmem:[#allocation5 + $0x50] sm:$0xff]
        %v282 = vld [vmem:[#allocation5 + $0x58] sm:$0xff]
        %v283 = vld [vmem:[#allocation5 + $0x60] sm:$0xff]
        %v284 = vld [vmem:[#allocation5 + $0x68] sm:$0xff]
        %v285 = vld [vmem:[#allocation5 + $0x70] sm:$0xff]
        %v286 = vld [vmem:[#allocation5 + $0x78] sm:$0xff]
        %v287 = vld [vmem:[#allocation5 + $0x80] sm:$0xff]
        %v288 = vld [vmem:[#allocation5 + $0x88] sm:$0xff]
        %v289 = vld [vmem:[#allocation5 + $0x90] sm:$0xff]
        %v290 = vld [vmem:[#allocation5 + $0x98] sm:$0xff]
        %v291 = vld [vmem:[#allocation5 + $0xa0] sm:$0xff]
        %v292 = vld [vmem:[#allocation5 + $0xa8] sm:$0xff]
        %v293 = vld [vmem:[#allocation5 + $0xb0] sm:$0xff]
        %v294 = vld [vmem:[#allocation5 + $0xb8] sm:$0xff]
        %v295 = vld [vmem:[#allocation5 + $0xc0] sm:$0xff]
        %v296 = vld [vmem:[#allocation5 + $0xc8] sm:$0xff]
        %v297 = vld [vmem:[#allocation5 + $0xd0] sm:$0xff]
        %v298 = vld [vmem:[#allocation5 + $0xd8] sm:$0xff]
        %v299 = vld [vmem:[#allocation5 + $0xe0] sm:$0xff]
        %v300 = vld [vmem:[#allocation5 + $0xe8] sm:$0xff]
        %v301 = vld [vmem:[#allocation5 + $0xf0] sm:$0xff]
        %v302 = vld [vmem:[#allocation5 + $0xf8] sm:$0xff]
        %v303 = vld [vmem:[#allocation5 + $0x100] sm:$0xff]
        %v304 = vld [vmem:[#allocation5 + $0x108] sm:$0xff]
        %v305 = vld [vmem:[#allocation5 + $0x110] sm:$0xff]
        %v306 = vld [vmem:[#allocation5 + $0x118] sm:$0xff]
        %v307 = vld [vmem:[#allocation5 + $0x120] sm:$0xff]
        %v308 = vld [vmem:[#allocation5 + $0x128] sm:$0xff]
        %v309 = vld [vmem:[#allocation5 + $0x130] sm:$0xff]
        %v310 = vld [vmem:[#allocation5 + $0x138] sm:$0xff]
        %v311 = vld [vmem:[#allocation5 + $0x140] sm:$0xff]
        %v312 = vld [vmem:[#allocation5 + $0x148] sm:$0xff]
        %v313 = vld [vmem:[#allocation5 + $0x150] sm:$0xff]
        %v314 = vld [vmem:[#allocation5 + $0x158] sm:$0xff]
        %v315 = vld [vmem:[#allocation5 + $0x160] sm:$0xff]
        %v316 = vld [vmem:[#allocation5 + $0x168] sm:$0xff]
        %v317 = vld [vmem:[#allocation5 + $0x170] sm:$0xff]
        %v318 = vld [vmem:[#allocation5 + $0x178] sm:$0xff]
        %v319 = vld [vmem:[#allocation5 + $0x180] sm:$0xff]
        %v320 = vld [vmem:[#allocation5 + $0x188] sm:$0xff]
        %v321 = vld [vmem:[#allocation5 + $0x190] sm:$0xff]
        %v322 = vld [vmem:[#allocation5 + $0x198] sm:$0xff]
        %v323 = vld [vmem:[#allocation5 + $0x1a0] sm:$0xff]
        %v324 = vld [vmem:[#allocation5 + $0x1a8] sm:$0xff]
        %v325 = vld [vmem:[#allocation5 + $0x1b0] sm:$0xff]
        %v326 = vld [vmem:[#allocation5 + $0x1b8] sm:$0xff]
        %v327 = vld [vmem:[#allocation5 + $0x1c0] sm:$0xff]
        %v328 = vld [vmem:[#allocation5 + $0x1c8] sm:$0xff]
        %v329 = vld [vmem:[#allocation5 + $0x1d0] sm:$0xff]
        %v330 = vld [vmem:[#allocation5 + $0x1d8] sm:$0xff]
        %v331 = vld [vmem:[#allocation5 + $0x1e0] sm:$0xff]
        %v332 = vld [vmem:[#allocation5 + $0x1e8] sm:$0xff]
        %v333 = vld [vmem:[#allocation5 + $0x1f0] sm:$0xff]
        %v334 = vld [vmem:[#allocation5 + $0x1f8] sm:$0xff]
        %v335 = vld [vmem:[#allocation5 + $0x200] sm:$0xff]
        %v336 = vld [vmem:[#allocation5 + $0x208] sm:$0xff]
        %v337 = vld [vmem:[#allocation5 + $0x210] sm:$0xff]
        %v338 = vld [vmem:[#allocation5 + $0x218] sm:$0xff]
        %v339 = vld [vmem:[#allocation5 + $0x220] sm:$0xff]
        %v340 = vld [vmem:[#allocation5 + $0x228] sm:$0xff]
        %v341 = vld [vmem:[#allocation5 + $0x230] sm:$0xff]
        %v342 = vld [vmem:[#allocation5 + $0x238] sm:$0xff]
        %v343 = vld [vmem:[#allocation5 + $0x240] sm:$0xff]
        %v344 = vld [vmem:[#allocation5 + $0x248] sm:$0xff]
        %v345 = vld [vmem:[#allocation5 + $0x250] sm:$0xff]
        %v346 = vld [vmem:[#allocation5 + $0x258] sm:$0xff]
        %v347 = vld [vmem:[#allocation5 + $0x260] sm:$0xff]
        %v348 = vld [vmem:[#allocation5 + $0x268] sm:$0xff]
        %v349 = vld [vmem:[#allocation5 + $0x270] sm:$0xff]
        %v350 = vld [vmem:[#allocation5 + $0x278] sm:$0xff]
        %v351 = vld [vmem:[#allocation5 + $0x280] sm:$0xff]
        %v352 = vld [vmem:[#allocation5 + $0x288] sm:$0xff]
        %v353 = vld [vmem:[#allocation5 + $0x290] sm:$0xff]
        %v354 = vld [vmem:[#allocation5 + $0x298] sm:$0xff]
        %v355 = vld [vmem:[#allocation5 + $0x2a0] sm:$0xff]
        %v356 = vld [vmem:[#allocation5 + $0x2a8] sm:$0xff]
        %v357 = vld [vmem:[#allocation5 + $0x2b0] sm:$0xff]
        %v358 = vld [vmem:[#allocation5 + $0x2b8] sm:$0xff]
        %v359 = vld [vmem:[#allocation5 + $0x2c0] sm:$0xff]
        %v360 = vld [vmem:[#allocation5 + $0x2c8] sm:$0xff]
        %v361 = vld [vmem:[#allocation5 + $0x2d0] sm:$0xff]
        %v362 = vld [vmem:[#allocation5 + $0x2d8] sm:$0xff]
        %v363 = vld [vmem:[#allocation5 + $0x2e0] sm:$0xff]
        %v364 = vld [vmem:[#allocation5 + $0x2e8] sm:$0xff]
        %v365 = vld [vmem:[#allocation5 + $0x2f0] sm:$0xff]
        %v366 = vld [vmem:[#allocation5 + $0x2f8] sm:$0xff]
        %v367 = vld [vmem:[#allocation5 + $0x300] sm:$0xff]
        %v368 = vld [vmem:[#allocation5 + $0x308] sm:$0xff]
        %v369 = vld [vmem:[#allocation5 + $0x310] sm:$0xff]
        %v370 = vld [vmem:[#allocation5 + $0x318] sm:$0xff]
        %v371 = vld [vmem:[#allocation5 + $0x320] sm:$0xff]
        %v372 = vld [vmem:[#allocation5 + $0x328] sm:$0xff]
        %v373 = vld [vmem:[#allocation5 + $0x330] sm:$0xff]
        %v374 = vld [vmem:[#allocation5 + $0x338] sm:$0xff]
        %v375 = vld [vmem:[#allocation5 + $0x340] sm:$0xff]
        %v376 = vld [vmem:[#allocation5 + $0x348] sm:$0xff]
        %v377 = vld [vmem:[#allocation5 + $0x350] sm:$0xff]
        %v378 = vld [vmem:[#allocation5 + $0x358] sm:$0xff]
        %v379 = vld [vmem:[#allocation5 + $0x360] sm:$0xff]
        %v380 = vld [vmem:[#allocation5 + $0x368] sm:$0xff]
        %v381 = vld [vmem:[#allocation5 + $0x370] sm:$0xff]
        %v382 = vld [vmem:[#allocation5 + $0x378] sm:$0xff]
        %v383 = vld [vmem:[#allocation5 + $0x380] sm:$0xff]
        %v384 = vld [vmem:[#allocation5 + $0x388] sm:$0xff]
        %v385 = vld [vmem:[#allocation5 + $0x390] sm:$0xff]
        %v386 = vld [vmem:[#allocation5 + $0x398] sm:$0xff]
        %v387 = vld [vmem:[#allocation5 + $0x3a0] sm:$0xff]
        %v388 = vld [vmem:[#allocation5 + $0x3a8] sm:$0xff]
        %v389 = vld [vmem:[#allocation5 + $0x3b0] sm:$0xff]
        %v390 = vld [vmem:[#allocation5 + $0x3b8] sm:$0xff]
        %v391 = vld [vmem:[#allocation5 + $0x3c0] sm:$0xff]
        %v392 = vld [vmem:[#allocation5 + $0x3c8] sm:$0xff]
        %v393 = vld [vmem:[#allocation5 + $0x3d0] sm:$0xff]
        %v394 = vld [vmem:[#allocation5 + $0x3d8] sm:$0xff]
        %v395 = vld [vmem:[#allocation5 + $0x3e0] sm:$0xff]
        %v396 = vld [vmem:[#allocation5 + $0x3e8] sm:$0xff]
        %v397 = vld [vmem:[#allocation5 + $0x3f0] sm:$0xff]
        %v398 = vld [vmem:[#allocation5 + $0x3f8] sm:$0xff]
        %v399 = vld [vmem:[#allocation5 + $0x400] sm:$0xff]
        %v400 = vld [vmem:[#allocation5 + $0x408] sm:$0xff]
        %v401 = vld [vmem:[#allocation5 + $0x410] sm:$0xff]
        %v402 = vld [vmem:[#allocation5 + $0x418] sm:$0xff]
        %v403 = vld [vmem:[#allocation5 + $0x420] sm:$0xff]
        %v404 = vld [vmem:[#allocation5 + $0x428] sm:$0xff]
        %v405 = vld [vmem:[#allocation5 + $0x430] sm:$0xff]
        %v406 = vld [vmem:[#allocation5 + $0x438] sm:$0xff]
        %v407 = vld [vmem:[#allocation5 + $0x440] sm:$0xff]
        %v408 = vld [vmem:[#allocation5 + $0x448] sm:$0xff]
        %v409 = vld [vmem:[#allocation5 + $0x450] sm:$0xff]
        %v410 = vld [vmem:[#allocation5 + $0x458] sm:$0xff]
        %v411 = vld [vmem:[#allocation5 + $0x460] sm:$0xff]
        %v412 = vld [vmem:[#allocation5 + $0x468] sm:$0xff]
        %v413 = vld [vmem:[#allocation5 + $0x470] sm:$0xff]
        %v414 = vld [vmem:[#allocation5 + $0x478] sm:$0xff]
        %v415 = vld [vmem:[#allocation5 + $0x480] sm:$0xff]
        %v416 = vld [vmem:[#allocation5 + $0x488] sm:$0xff]
        %v417 = vld [vmem:[#allocation5 + $0x490] sm:$0xff]
        %v418 = vld [vmem:[#allocation5 + $0x498] sm:$0xff]
        %v419 = vld [vmem:[#allocation5 + $0x4a0] sm:$0xff]
        %v420 = vld [vmem:[#allocation5 + $0x4a8] sm:$0xff]
        %v421 = vld [vmem:[#allocation5 + $0x4b0] sm:$0xff]
        %v422 = vld [vmem:[#allocation5 + $0x4b8] sm:$0xff]
        %v423 = vld [vmem:[#allocation5 + $0x4c0] sm:$0xff]
        %v424 = vld [vmem:[#allocation5 + $0x4c8] sm:$0xff]
        %v425 = vld [vmem:[#allocation5 + $0x4d0] sm:$0xff]
        %v426 = vld [vmem:[#allocation5 + $0x4d8] sm:$0xff]
        %v427 = vld [vmem:[#allocation5 + $0x4e0] sm:$0xff]
        %v428 = vld [vmem:[#allocation5 + $0x4e8] sm:$0xff]
        %v429 = vld [vmem:[#allocation5 + $0x4f0] sm:$0xff]
        %v430 = vld [vmem:[#allocation5 + $0x4f8] sm:$0xff]
        %v431 = vld [vmem:[#allocation5 + $0x500] sm:$0xff]
        %v432 = vld [vmem:[#allocation5 + $0x508] sm:$0xff]
        %v433 = vld [vmem:[#allocation5 + $0x510] sm:$0xff]
        %v434 = vld [vmem:[#allocation5 + $0x518] sm:$0xff]
        %v435 = vld [vmem:[#allocation5 + $0x520] sm:$0xff]
        %v436 = vld [vmem:[#allocation5 + $0x528] sm:$0xff]
        %v437 = vld [vmem:[#allocation5 + $0x530] sm:$0xff]
        %v438 = vld [vmem:[#allocation5 + $0x538] sm:$0xff]
        %v439 = vld [vmem:[#allocation5 + $0x540] sm:$0xff]
        %v440 = vld [vmem:[#allocation5 + $0x548] sm:$0xff]
        %v441 = vld [vmem:[#allocation5 + $0x550] sm:$0xff]
        %v442 = vld [vmem:[#allocation5 + $0x558] sm:$0xff]
        %v443 = vld [vmem:[#allocation5 + $0x560] sm:$0xff]
        %v444 = vld [vmem:[#allocation5 + $0x568] sm:$0xff]
        %v445 = vld [vmem:[#allocation5 + $0x570] sm:$0xff]
        %v446 = vld [vmem:[#allocation5 + $0x578] sm:$0xff]
        %v447 = vld [vmem:[#allocation5 + $0x580] sm:$0xff]
        %v448 = vld [vmem:[#allocation5 + $0x588] sm:$0xff]
        %v449 = vld [vmem:[#allocation5 + $0x590] sm:$0xff]
        %v450 = vld [vmem:[#allocation5 + $0x598] sm:$0xff]
        %v451 = vld [vmem:[#allocation5 + $0x5a0] sm:$0xff]
        %v452 = vld [vmem:[#allocation5 + $0x5a8] sm:$0xff]
        %v453 = vld [vmem:[#allocation5 + $0x5b0] sm:$0xff]
        %v454 = vld [vmem:[#allocation5 + $0x5b8] sm:$0xff]
        %v455 = vld [vmem:[#allocation5 + $0x5c0] sm:$0xff]
        %v456 = vld [vmem:[#allocation5 + $0x5c8] sm:$0xff]
        %v457 = vld [vmem:[#allocation5 + $0x5d0] sm:$0xff]
        %v458 = vld [vmem:[#allocation5 + $0x5d8] sm:$0xff]
        %v459 = vld [vmem:[#allocation5 + $0x5e0] sm:$0xff]
        %v460 = vld [vmem:[#allocation5 + $0x5e8] sm:$0xff]
        %v461 = vld [vmem:[#allocation5 + $0x5f0] sm:$0xff]
        %v462 = vld [vmem:[#allocation5 + $0x5f8] sm:$0xff]
        %v463 = vld [vmem:[#allocation5 + $0x600] sm:$0xff]
        %v464 = vld [vmem:[#allocation5 + $0x608] sm:$0xff]
        %v465 = vld [vmem:[#allocation5 + $0x610] sm:$0xff]
        %v466 = vld [vmem:[#allocation5 + $0x618] sm:$0xff]
        %v467 = vld [vmem:[#allocation5 + $0x620] sm:$0xff]
        %v468 = vld [vmem:[#allocation5 + $0x628] sm:$0xff]
        %v469 = vld [vmem:[#allocation5 + $0x630] sm:$0xff]
        %v470 = vld [vmem:[#allocation5 + $0x638] sm:$0xff]
        %v471 = vld [vmem:[#allocation5 + $0x640] sm:$0xff]
        %v472 = vld [vmem:[#allocation5 + $0x648] sm:$0xff]
        %v473 = vld [vmem:[#allocation5 + $0x650] sm:$0xff]
        %v474 = vld [vmem:[#allocation5 + $0x658] sm:$0xff]
        %v475 = vld [vmem:[#allocation5 + $0x660] sm:$0xff]
        %v476 = vld [vmem:[#allocation5 + $0x668] sm:$0xff]
        %v477 = vld [vmem:[#allocation5 + $0x670] sm:$0xff]
        %v478 = vld [vmem:[#allocation5 + $0x678] sm:$0xff]
        %v479 = vld [vmem:[#allocation5 + $0x680] sm:$0xff]
        %v480 = vld [vmem:[#allocation5 + $0x688] sm:$0xff]
        %v481 = vld [vmem:[#allocation5 + $0x690] sm:$0xff]
        %v482 = vld [vmem:[#allocation5 + $0x698] sm:$0xff]
        %v483 = vld [vmem:[#allocation5 + $0x6a0] sm:$0xff]
        %v484 = vld [vmem:[#allocation5 + $0x6a8] sm:$0xff]
        %v485 = vld [vmem:[#allocation5 + $0x6b0] sm:$0xff]
        %v486 = vld [vmem:[#allocation5 + $0x6b8] sm:$0xff]
        %v487 = vld [vmem:[#allocation5 + $0x6c0] sm:$0xff]
        %v488 = vld [vmem:[#allocation5 + $0x6c8] sm:$0xff]
        %v489 = vld [vmem:[#allocation5 + $0x6d0] sm:$0xff]
        %v490 = vld [vmem:[#allocation5 + $0x6d8] sm:$0xff]
        %v491 = vld [vmem:[#allocation5 + $0x6e0] sm:$0xff]
        %v492 = vld [vmem:[#allocation5 + $0x6e8] sm:$0xff]
        %v493 = vld [vmem:[#allocation5 + $0x6f0] sm:$0xff]
        %v494 = vld [vmem:[#allocation5 + $0x6f8] sm:$0xff]
        %v495 = vld [vmem:[#allocation5 + $0x700] sm:$0xff]
        %v496 = vld [vmem:[#allocation5 + $0x708] sm:$0xff]
        %v497 = vld [vmem:[#allocation5 + $0x710] sm:$0xff]
        %v498 = vld [vmem:[#allocation5 + $0x718] sm:$0xff]
        %v499 = vld [vmem:[#allocation5 + $0x720] sm:$0xff]
        %v500 = vld [vmem:[#allocation5 + $0x728] sm:$0xff]
        %v501 = vld [vmem:[#allocation5 + $0x730] sm:$0xff]
        %v502 = vld [vmem:[#allocation5 + $0x738] sm:$0xff]
        %v503 = vld [vmem:[#allocation5 + $0x740] sm:$0xff]
        %v504 = vld [vmem:[#allocation5 + $0x748] sm:$0xff]
        %v505 = vld [vmem:[#allocation5 + $0x750] sm:$0xff]
        %v506 = vld [vmem:[#allocation5 + $0x758] sm:$0xff]
        %v507 = vld [vmem:[#allocation5 + $0x760] sm:$0xff]
        %v508 = vld [vmem:[#allocation5 + $0x768] sm:$0xff]
        %v509 = vld [vmem:[#allocation5 + $0x770] sm:$0xff]
        %v510 = vld [vmem:[#allocation5 + $0x778] sm:$0xff]
        %v511 = vld [vmem:[#allocation5 + $0x780] sm:$0xff]
        %v512 = vld [vmem:[#allocation5 + $0x788] sm:$0xff]
        %v513 = vld [vmem:[#allocation5 + $0x790] sm:$0xff]
        %v514 = vld [vmem:[#allocation5 + $0x798] sm:$0xff]
        %v515 = vld [vmem:[#allocation5 + $0x7a0] sm:$0xff]
        %v516 = vld [vmem:[#allocation5 + $0x7a8] sm:$0xff]
        %v517 = vld [vmem:[#allocation5 + $0x7b0] sm:$0xff]
        %v518 = vld [vmem:[#allocation5 + $0x7b8] sm:$0xff]
        %v519 = vld [vmem:[#allocation5 + $0x7c0] sm:$0xff]
        %v520 = vld [vmem:[#allocation5 + $0x7c8] sm:$0xff]
        %v521 = vld [vmem:[#allocation5 + $0x7d0] sm:$0xff]
        %v522 = vld [vmem:[#allocation5 + $0x7d8] sm:$0xff]
        %v523 = vld [vmem:[#allocation5 + $0x7e0] sm:$0xff]
        %v524 = vld [vmem:[#allocation5 + $0x7e8] sm:$0xff]
        %v525 = vld [vmem:[#allocation5 + $0x7f0] sm:$0xff]
        %v526 = vld [vmem:[#allocation5 + $0x7f8] sm:$0xff]
        %v528 = vcombine.high %v270, %v270
        %530 = vmatprep.subr.mxu0 %v392
        %531 = vmatpush1.msra.mxu0 %v391
        %532 = vmatprep.subr.mxu0 %v384
        %533 = vmatpush1.msra.mxu0 %v383
        %534 = vmatprep.subr.mxu0 %v376
        %535 = vmatpush1.msra.mxu0 %v375
        %536 = vmatprep.subr.mxu0 %v368
        %537 = vmatpush1.msra.mxu0 %v367
        %538 = vmatprep.subr.mxu0 %v360
        %539 = vmatpush1.msra.mxu0 %v359
        %540 = vmatprep.subr.mxu0 %v352
        %541 = vmatpush1.msra.mxu0 %v351
        %542 = vmatprep.subr.mxu0 %v344
        %543 = vmatpush1.msra.mxu0 %v343
        %544 = vmatprep.subr.mxu0 %v336
        %545 = vmatpush1.msra.mxu0 %v335
        %546 = vmatprep.subr.mxu0 %v328
        %547 = vmatpush1.msra.mxu0 %v327
        %548 = vmatprep.subr.mxu0 %v320
        %549 = vmatpush1.msra.mxu0 %v319
        %550 = vmatprep.subr.mxu0 %v312
        %551 = vmatpush1.msra.mxu0 %v311
        %552 = vmatprep.subr.mxu0 %v304
        %553 = vmatpush1.msra.mxu0 %v303
        %554 = vmatprep.subr.mxu0 %v296
        %555 = vmatpush1.msra.mxu0 %v295
        %556 = vmatprep.subr.mxu0 %v288
        %557 = vmatpush1.msra.mxu0 %v287
        %558 = vmatprep.subr.mxu0 %v280
        %559 = vmatpush1.msra.mxu0 %v279
        %560 = vmatprep.subr.mxu0 %v272
        %561 = vmatpush1.msra.mxu0 %v271
        %562 = vmatprep.subr.mxu0 %v520
        %563 = vmatpush2.msra.mxu0 %v519
        %564 = vmatprep.subr.mxu0 %v512
        %565 = vmatpush2.msra.mxu0 %v511
        %566 = vmatprep.subr.mxu0 %v504
        %567 = vmatpush2.msra.mxu0 %v503
        %568 = vmatprep.subr.mxu0 %v496
        %569 = vmatpush2.msra.mxu0 %v495
        %570 = vmatprep.subr.mxu0 %v488
        %571 = vmatpush2.msra.mxu0 %v487
        %572 = vmatprep.subr.mxu0 %v480
        %573 = vmatpush2.msra.mxu0 %v479
        %574 = vmatprep.subr.mxu0 %v472
        %575 = vmatpush2.msra.mxu0 %v471
        %576 = vmatprep.subr.mxu0 %v464
        %577 = vmatpush2.msra.mxu0 %v463
        %578 = vmatprep.subr.mxu0 %v456
        %579 = vmatpush2.msra.mxu0 %v455
        %580 = vmatprep.subr.mxu0 %v448
        %581 = vmatpush2.msra.mxu0 %v447
        %582 = vmatprep.subr.mxu0 %v440
        %583 = vmatpush2.msra.mxu0 %v439
        %584 = vmatprep.subr.mxu0 %v432
        %585 = vmatpush2.msra.mxu0 %v431
        %586 = vmatprep.subr.mxu0 %v424
        %587 = vmatpush2.msra.mxu0 %v423
        %588 = vmatprep.subr.mxu0 %v416
        %589 = vmatpush2.msra.mxu0 %v415
        %590 = vmatprep.subr.mxu0 %v408
        %591 = vmatpush2.msra.mxu0 %v407
        %592 = vmatprep.subr.mxu0 %v400
        %593 = vmatpush2.msra.mxu0 %v399
        %594 = vmatprep.mubr.f32.mxu0 %v528
        %595 = vmatmul.mubr.f32.gmra.mxu0 %v270
        %v596 = vpop.f32.mrf.mxu0
        %v597 = vadd.f32 0.0, %v596
        %v598 = vpop.f32.mrf.mxu0
        %v599 = vadd.f32 0.0, %v598
        %600 = vdwg.mxu0
        %601 = vmatprep.subr.mxu0 %v394
        %602 = vmatpush1.msra.mxu0 %v393
        %603 = vmatprep.subr.mxu0 %v386
        %604 = vmatpush1.msra.mxu0 %v385
        %605 = vmatprep.subr.mxu0 %v378
        %606 = vmatpush1.msra.mxu0 %v377
        %607 = vmatprep.subr.mxu0 %v370
        %608 = vmatpush1.msra.mxu0 %v369
        %609 = vmatprep.subr.mxu0 %v362
        %610 = vmatpush1.msra.mxu0 %v361
        %611 = vmatprep.subr.mxu0 %v354
        %612 = vmatpush1.msra.mxu0 %v353
        %613 = vmatprep.subr.mxu0 %v346
        %614 = vmatpush1.msra.mxu0 %v345
        %615 = vmatprep.subr.mxu0 %v338
        %616 = vmatpush1.msra.mxu0 %v337
        %617 = vmatprep.subr.mxu0 %v330
        %618 = vmatpush1.msra.mxu0 %v329
        %619 = vmatprep.subr.mxu0 %v322
        %620 = vmatpush1.msra.mxu0 %v321
        %621 = vmatprep.subr.mxu0 %v314
        %622 = vmatpush1.msra.mxu0 %v313
        %623 = vmatprep.subr.mxu0 %v306
        %624 = vmatpush1.msra.mxu0 %v305
        %625 = vmatprep.subr.mxu0 %v298
        %626 = vmatpush1.msra.mxu0 %v297
        %627 = vmatprep.subr.mxu0 %v290
        %628 = vmatpush1.msra.mxu0 %v289
        %629 = vmatprep.subr.mxu0 %v282
        %630 = vmatpush1.msra.mxu0 %v281
        %631 = vmatprep.subr.mxu0 %v274
        %632 = vmatpush1.msra.mxu0 %v273
        %633 = vmatprep.subr.mxu0 %v522
        %634 = vmatpush2.msra.mxu0 %v521
        %635 = vmatprep.subr.mxu0 %v514
        %636 = vmatpush2.msra.mxu0 %v513
        %637 = vmatprep.subr.mxu0 %v506
        %638 = vmatpush2.msra.mxu0 %v505
        %639 = vmatprep.subr.mxu0 %v498
        %640 = vmatpush2.msra.mxu0 %v497
        %641 = vmatprep.subr.mxu0 %v490
        %642 = vmatpush2.msra.mxu0 %v489
        %643 = vmatprep.subr.mxu0 %v482
        %644 = vmatpush2.msra.mxu0 %v481
        %645 = vmatprep.subr.mxu0 %v474
        %646 = vmatpush2.msra.mxu0 %v473
        %647 = vmatprep.subr.mxu0 %v466
        %648 = vmatpush2.msra.mxu0 %v465
        %649 = vmatprep.subr.mxu0 %v458
        %650 = vmatpush2.msra.mxu0 %v457
        %651 = vmatprep.subr.mxu0 %v450
        %652 = vmatpush2.msra.mxu0 %v449
        %653 = vmatprep.subr.mxu0 %v442
        %654 = vmatpush2.msra.mxu0 %v441
        %655 = vmatprep.subr.mxu0 %v434
        %656 = vmatpush2.msra.mxu0 %v433
        %657 = vmatprep.subr.mxu0 %v426
        %658 = vmatpush2.msra.mxu0 %v425
        %659 = vmatprep.subr.mxu0 %v418
        %660 = vmatpush2.msra.mxu0 %v417
        %661 = vmatprep.subr.mxu0 %v410
        %662 = vmatpush2.msra.mxu0 %v409
        %663 = vmatprep.subr.mxu0 %v402
        %664 = vmatpush2.msra.mxu0 %v401
        %665 = vmatprep.mubr.f32.mxu0 %v528
        %666 = vmatmul.mubr.f32.gmra.mxu0 %v270
        %v667 = vpop.f32.mrf.mxu0
        %v668 = vadd.f32 0.0, %v667
        %v669 = vpop.f32.mrf.mxu0
        %v670 = vadd.f32 0.0, %v669
        %671 = vdwg.mxu0
        %672 = vmatprep.subr.mxu0 %v396
        %673 = vmatpush1.msra.mxu0 %v395
        %674 = vmatprep.subr.mxu0 %v388
        %675 = vmatpush1.msra.mxu0 %v387
        %676 = vmatprep.subr.mxu0 %v380
        %677 = vmatpush1.msra.mxu0 %v379
        %678 = vmatprep.subr.mxu0 %v372
        %679 = vmatpush1.msra.mxu0 %v371
        %680 = vmatprep.subr.mxu0 %v364
        %681 = vmatpush1.msra.mxu0 %v363
        %682 = vmatprep.subr.mxu0 %v356
        %683 = vmatpush1.msra.mxu0 %v355
        %684 = vmatprep.subr.mxu0 %v348
        %685 = vmatpush1.msra.mxu0 %v347
        %686 = vmatprep.subr.mxu0 %v340
        %687 = vmatpush1.msra.mxu0 %v339
        %688 = vmatprep.subr.mxu0 %v332
        %689 = vmatpush1.msra.mxu0 %v331
        %690 = vmatprep.subr.mxu0 %v324
        %691 = vmatpush1.msra.mxu0 %v323
        %692 = vmatprep.subr.mxu0 %v316
        %693 = vmatpush1.msra.mxu0 %v315
        %694 = vmatprep.subr.mxu0 %v308
        %695 = vmatpush1.msra.mxu0 %v307
        %696 = vmatprep.subr.mxu0 %v300
        %697 = vmatpush1.msra.mxu0 %v299
        %698 = vmatprep.subr.mxu0 %v292
        %699 = vmatpush1.msra.mxu0 %v291
        %700 = vmatprep.subr.mxu0 %v284
        %701 = vmatpush1.msra.mxu0 %v283
        %702 = vmatprep.subr.mxu0 %v276
        %703 = vmatpush1.msra.mxu0 %v275
        %704 = vmatprep.subr.mxu0 %v524
        %705 = vmatpush2.msra.mxu0 %v523
        %706 = vmatprep.subr.mxu0 %v516
        %707 = vmatpush2.msra.mxu0 %v515
        %708 = vmatprep.subr.mxu0 %v508
        %709 = vmatpush2.msra.mxu0 %v507
        %710 = vmatprep.subr.mxu0 %v500
        %711 = vmatpush2.msra.mxu0 %v499
        %712 = vmatprep.subr.mxu0 %v492
        %713 = vmatpush2.msra.mxu0 %v491
        %714 = vmatprep.subr.mxu0 %v484
        %715 = vmatpush2.msra.mxu0 %v483
        %716 = vmatprep.subr.mxu0 %v476
        %717 = vmatpush2.msra.mxu0 %v475
        %718 = vmatprep.subr.mxu0 %v468
        %719 = vmatpush2.msra.mxu0 %v467
        %720 = vmatprep.subr.mxu0 %v460
        %721 = vmatpush2.msra.mxu0 %v459
        %722 = vmatprep.subr.mxu0 %v452
        %723 = vmatpush2.msra.mxu0 %v451
        %724 = vmatprep.subr.mxu0 %v444
        %725 = vmatpush2.msra.mxu0 %v443
        %726 = vmatprep.subr.mxu0 %v436
        %727 = vmatpush2.msra.mxu0 %v435
        %728 = vmatprep.subr.mxu0 %v428
        %729 = vmatpush2.msra.mxu0 %v427
        %730 = vmatprep.subr.mxu0 %v420
        %731 = vmatpush2.msra.mxu0 %v419
        %732 = vmatprep.subr.mxu0 %v412
        %733 = vmatpush2.msra.mxu0 %v411
        %734 = vmatprep.subr.mxu0 %v404
        %735 = vmatpush2.msra.mxu0 %v403
        %736 = vmatprep.mubr.f32.mxu0 %v528
        %737 = vmatmul.mubr.f32.gmra.mxu0 %v270
        %v738 = vpop.f32.mrf.mxu0
        %v739 = vadd.f32 0.0, %v738
        %v740 = vpop.f32.mrf.mxu0
        %v741 = vadd.f32 0.0, %v740
        %742 = vdwg.mxu0
        %743 = vmatprep.subr.mxu0 %v398
        %744 = vmatpush1.msra.mxu0 %v397
        %745 = vmatprep.subr.mxu0 %v390
        %746 = vmatpush1.msra.mxu0 %v389
        %747 = vmatprep.subr.mxu0 %v382
        %748 = vmatpush1.msra.mxu0 %v381
        %749 = vmatprep.subr.mxu0 %v374
        %750 = vmatpush1.msra.mxu0 %v373
        %751 = vmatprep.subr.mxu0 %v366
        %752 = vmatpush1.msra.mxu0 %v365
        %753 = vmatprep.subr.mxu0 %v358
        %754 = vmatpush1.msra.mxu0 %v357
        %755 = vmatprep.subr.mxu0 %v350
        %756 = vmatpush1.msra.mxu0 %v349
        %757 = vmatprep.subr.mxu0 %v342
        %758 = vmatpush1.msra.mxu0 %v341
        %759 = vmatprep.subr.mxu0 %v334
        %760 = vmatpush1.msra.mxu0 %v333
        %761 = vmatprep.subr.mxu0 %v326
        %762 = vmatpush1.msra.mxu0 %v325
        %763 = vmatprep.subr.mxu0 %v318
        %764 = vmatpush1.msra.mxu0 %v317
        %765 = vmatprep.subr.mxu0 %v310
        %766 = vmatpush1.msra.mxu0 %v309
        %767 = vmatprep.subr.mxu0 %v302
        %768 = vmatpush1.msra.mxu0 %v301
        %769 = vmatprep.subr.mxu0 %v294
        %770 = vmatpush1.msra.mxu0 %v293
        %771 = vmatprep.subr.mxu0 %v286
        %772 = vmatpush1.msra.mxu0 %v285
        %773 = vmatprep.subr.mxu0 %v278
        %774 = vmatpush1.msra.mxu0 %v277
        %775 = vmatprep.subr.mxu0 %v526
        %776 = vmatpush2.msra.mxu0 %v525
        %777 = vmatprep.subr.mxu0 %v518
        %778 = vmatpush2.msra.mxu0 %v517
        %779 = vmatprep.subr.mxu0 %v510
        %780 = vmatpush2.msra.mxu0 %v509
        %781 = vmatprep.subr.mxu0 %v502
        %782 = vmatpush2.msra.mxu0 %v501
        %783 = vmatprep.subr.mxu0 %v494
        %784 = vmatpush2.msra.mxu0 %v493
        %785 = vmatprep.subr.mxu0 %v486
        %786 = vmatpush2.msra.mxu0 %v485
        %787 = vmatprep.subr.mxu0 %v478
        %788 = vmatpush2.msra.mxu0 %v477
        %789 = vmatprep.subr.mxu0 %v470
        %790 = vmatpush2.msra.mxu0 %v469
        %791 = vmatprep.subr.mxu0 %v462
        %792 = vmatpush2.msra.mxu0 %v461
        %793 = vmatprep.subr.mxu0 %v454
        %794 = vmatpush2.msra.mxu0 %v453
        %795 = vmatprep.subr.mxu0 %v446
        %796 = vmatpush2.msra.mxu0 %v445
        %797 = vmatprep.subr.mxu0 %v438
        %798 = vmatpush2.msra.mxu0 %v437
        %799 = vmatprep.subr.mxu0 %v430
        %800 = vmatpush2.msra.mxu0 %v429
        %801 = vmatprep.subr.mxu0 %v422
        %802 = vmatpush2.msra.mxu0 %v421
        %803 = vmatprep.subr.mxu0 %v414
        %804 = vmatpush2.msra.mxu0 %v413
        %805 = vmatprep.subr.mxu0 %v406
        %806 = vmatpush2.msra.mxu0 %v405
        %807 = vmatprep.mubr.f32.mxu0 %v528
        %808 = vmatmul.mubr.f32.gmra.mxu0 %v270
        %v809 = vpop.f32.mrf.mxu0
        %v810 = vadd.f32 0.0, %v809
        %v811 = vpop.f32.mrf.mxu0
        %v812 = vadd.f32 0.0, %v811
        %813 = vdwg.mxu0
        %822 = vrot.lane.b32.xlu0 %v597, 33
        %v823 = vpop.permute.xlu0 %822
        %824 = vrot.lane.b32.xlu0 %v599, 33
        %v825 = vpop.permute.xlu0 %824
        %826 = vrot.lane.b32.xlu0 %v668, 33
        %v827 = vpop.permute.xlu0 %826
        %828 = vrot.lane.b32.xlu0 %v670, 33
        %v829 = vpop.permute.xlu0 %828
        %830 = vrot.lane.b32.xlu0 %v739, 33
        %v831 = vpop.permute.xlu0 %830
        %832 = vrot.lane.b32.xlu0 %v741, 33
        %v833 = vpop.permute.xlu0 %832
        %834 = vrot.lane.b32.xlu0 %v810, 33
        %v835 = vpop.permute.xlu0 %834
        %836 = vrot.lane.b32.xlu0 %v812, 33
        %v837 = vpop.permute.xlu0 %836
        %vm838 = vcmask 269312
        %v839 = vsel %vm838, %v823, %v825
        %v840 = vsel %vm838, %v825, %v827
        %v841 = vsel %vm838, %v827, %v829
        %v842 = vsel %vm838, %v829, %v831
        %v843 = vsel %vm838, %v831, %v833
        %v844 = vsel %vm838, %v833, %v835
        %v845 = vsel %vm838, %v835, %v837
        %v854 = vsel %vm838, 0.0, %v823
        %v855 = vld [vmem:[#allocation7] ss:$8 sm:$0xf]
        %v856 = vld [vmem:[#allocation7] ss:$8 sm:$0xf0]
        %v857 = vor.u32 %v855, %v856
        %v859 = vlaneseq
        %v860 = vshrl.u32 %v859, 7
        %v861 = vsub.s32 0, %v860
        %v862 = vrot.slane %v857, %v861
        %v863 = vlaneseq
        %v864 = vshrl.u32 %v863, 7
        %v865 = vsub.s32 1, %v864
        %v866 = vrot.slane %v857, %v865
        %v867 = vlaneseq
        %v868 = vshrl.u32 %v867, 7
        %v869 = vsub.s32 2, %v868
        %v870 = vrot.slane %v857, %v869
        %v871 = vlaneseq
        %v872 = vshrl.u32 %v871, 7
        %v873 = vsub.s32 3, %v872
        %v874 = vrot.slane %v857, %v873
        %v875 = vlaneseq
        %v876 = vshrl.u32 %v875, 7
        %v877 = vsub.s32 4, %v876
        %v878 = vrot.slane %v857, %v877
        %v879 = vlaneseq
        %v880 = vshrl.u32 %v879, 7
        %v881 = vsub.s32 5, %v880
        %v882 = vrot.slane %v857, %v881
        %v883 = vlaneseq
        %v884 = vshrl.u32 %v883, 7
        %v885 = vsub.s32 6, %v884
        %v886 = vrot.slane %v857, %v885
        %v887 = vlaneseq
        %v888 = vshrl.u32 %v887, 7
        %v889 = vsub.s32 7, %v888
        %v890 = vrot.slane %v857, %v889
        %v899 = vmul.f32 %v854, %v862
        %v900 = vmul.f32 %v839, %v866
        %v901 = vmul.f32 %v840, %v870
        %v902 = vmul.f32 %v841, %v874
        %v903 = vmul.f32 %v842, %v878
        %v904 = vmul.f32 %v843, %v882
        %v905 = vmul.f32 %v844, %v886
        %v906 = vmul.f32 %v845, %v890
        %907 = vrot.lane.b32.xlu0 %v597, 32
        %v908 = vpop.permute.xlu0 %907
        %909 = vrot.lane.b32.xlu0 %v599, 32
        %v910 = vpop.permute.xlu0 %909
        %911 = vrot.lane.b32.xlu0 %v668, 32
        %v912 = vpop.permute.xlu0 %911
        %913 = vrot.lane.b32.xlu0 %v670, 32
        %v914 = vpop.permute.xlu0 %913
        %915 = vrot.lane.b32.xlu0 %v739, 32
        %v916 = vpop.permute.xlu0 %915
        %917 = vrot.lane.b32.xlu0 %v741, 32
        %v918 = vpop.permute.xlu0 %917
        %919 = vrot.lane.b32.xlu0 %v810, 32
        %v920 = vpop.permute.xlu0 %919
        %921 = vrot.lane.b32.xlu0 %v812, 32
        %v922 = vpop.permute.xlu0 %921
        %vm923 = vcmask 261120
        %v924 = vsel %vm923, %v908, %v910
        %v925 = vsel %vm923, %v910, %v912
        %v926 = vsel %vm923, %v912, %v914
        %v927 = vsel %vm923, %v914, %v916
        %v928 = vsel %vm923, %v916, %v918
        %v929 = vsel %vm923, %v918, %v920
        %v930 = vsel %vm923, %v920, %v922
        %v939 = vsel %vm923, 0.0, %v908
        %s940 = scalar_lea.vmem [#allocation7], 1
        %v941 = vld [vmem:[%s940] ss:$8 sm:$0xf]
        %v942 = vld [vmem:[%s940] ss:$8 sm:$0xf0]
        %v943 = vor.u32 %v941, %v942
        %v945 = vlaneseq
        %v946 = vshrl.u32 %v945, 7
        %v947 = vsub.s32 0, %v946
        %v948 = vrot.slane %v943, %v947
        %v949 = vlaneseq
        %v950 = vshrl.u32 %v949, 7
        %v951 = vsub.s32 1, %v950
        %v952 = vrot.slane %v943, %v951
        %v953 = vlaneseq
        %v954 = vshrl.u32 %v953, 7
        %v955 = vsub.s32 2, %v954
        %v956 = vrot.slane %v943, %v955
        %v957 = vlaneseq
        %v958 = vshrl.u32 %v957, 7
        %v959 = vsub.s32 3, %v958
        %v960 = vrot.slane %v943, %v959
        %v961 = vlaneseq
        %v962 = vshrl.u32 %v961, 7
        %v963 = vsub.s32 4, %v962
        %v964 = vrot.slane %v943, %v963
        %v965 = vlaneseq
        %v966 = vshrl.u32 %v965, 7
        %v967 = vsub.s32 5, %v966
        %v968 = vrot.slane %v943, %v967
        %v969 = vlaneseq
        %v970 = vshrl.u32 %v969, 7
        %v971 = vsub.s32 6, %v970
        %v972 = vrot.slane %v943, %v971
        %v973 = vlaneseq
        %v974 = vshrl.u32 %v973, 7
        %v975 = vsub.s32 7, %v974
        %v976 = vrot.slane %v943, %v975
        %v985 = vmul.f32 %v939, %v948
        %v986 = vmul.f32 %v924, %v952
        %v987 = vmul.f32 %v925, %v956
        %v988 = vmul.f32 %v926, %v960
        %v989 = vmul.f32 %v927, %v964
        %v990 = vmul.f32 %v928, %v968
        %v991 = vmul.f32 %v929, %v972
        %v992 = vmul.f32 %v930, %v976
        %993 = vrot.lane.b32.xlu0 %v597, 31
        %v994 = vpop.permute.xlu0 %993
        %995 = vrot.lane.b32.xlu0 %v599, 31
        %v996 = vpop.permute.xlu0 %995
        %997 = vrot.lane.b32.xlu0 %v668, 31
        %v998 = vpop.permute.xlu0 %997
        %999 = vrot.lane.b32.xlu0 %v670, 31
        %v1000 = vpop.permute.xlu0 %999
        %1001 = vrot.lane.b32.xlu0 %v739, 31
        %v1002 = vpop.permute.xlu0 %1001
        %1003 = vrot.lane.b32.xlu0 %v741, 31
        %v1004 = vpop.permute.xlu0 %1003
        %1005 = vrot.lane.b32.xlu0 %v810, 31
        %v1006 = vpop.permute.xlu0 %1005
        %1007 = vrot.lane.b32.xlu0 %v812, 31
        %v1008 = vpop.permute.xlu0 %1007
        %vm1009 = vcmask 252928
        %v1010 = vsel %vm1009, %v994, %v996
        %v1011 = vsel %vm1009, %v996, %v998
        %v1012 = vsel %vm1009, %v998, %v1000
        %v1013 = vsel %vm1009, %v1000, %v1002
        %v1014 = vsel %vm1009, %v1002, %v1004
        %v1015 = vsel %vm1009, %v1004, %v1006
        %v1016 = vsel %vm1009, %v1006, %v1008
        %v1025 = vsel %vm1009, 0.0, %v994
        %s1026 = scalar_lea.vmem [#allocation7], 2
        %v1027 = vld [vmem:[%s1026] ss:$8 sm:$0xf]
        %v1028 = vld [vmem:[%s1026] ss:$8 sm:$0xf0]
        %v1029 = vor.u32 %v1027, %v1028
        %v1031 = vlaneseq
        %v1032 = vshrl.u32 %v1031, 7
        %v1033 = vsub.s32 0, %v1032
        %v1034 = vrot.slane %v1029, %v1033
        %v1035 = vlaneseq
        %v1036 = vshrl.u32 %v1035, 7
        %v1037 = vsub.s32 1, %v1036
        %v1038 = vrot.slane %v1029, %v1037
        %v1039 = vlaneseq
        %v1040 = vshrl.u32 %v1039, 7
        %v1041 = vsub.s32 2, %v1040
        %v1042 = vrot.slane %v1029, %v1041
        %v1043 = vlaneseq
        %v1044 = vshrl.u32 %v1043, 7
        %v1045 = vsub.s32 3, %v1044
        %v1046 = vrot.slane %v1029, %v1045
        %v1047 = vlaneseq
        %v1048 = vshrl.u32 %v1047, 7
        %v1049 = vsub.s32 4, %v1048
        %v1050 = vrot.slane %v1029, %v1049
        %v1051 = vlaneseq
        %v1052 = vshrl.u32 %v1051, 7
        %v1053 = vsub.s32 5, %v1052
        %v1054 = vrot.slane %v1029, %v1053
        %v1055 = vlaneseq
        %v1056 = vshrl.u32 %v1055, 7
        %v1057 = vsub.s32 6, %v1056
        %v1058 = vrot.slane %v1029, %v1057
        %v1059 = vlaneseq
        %v1060 = vshrl.u32 %v1059, 7
        %v1061 = vsub.s32 7, %v1060
        %v1062 = vrot.slane %v1029, %v1061
        %v1071 = vmul.f32 %v1025, %v1034
        %v1072 = vmul.f32 %v1010, %v1038
        %v1073 = vmul.f32 %v1011, %v1042
        %v1074 = vmul.f32 %v1012, %v1046
        %v1075 = vmul.f32 %v1013, %v1050
        %v1076 = vmul.f32 %v1014, %v1054
        %v1077 = vmul.f32 %v1015, %v1058
        %v1078 = vmul.f32 %v1016, %v1062
        %1079 = vrot.lane.b32.xlu0 %v597, 1
        %v1080 = vpop.permute.xlu0 %1079
        %1081 = vrot.lane.b32.xlu0 %v599, 1
        %v1082 = vpop.permute.xlu0 %1081
        %1083 = vrot.lane.b32.xlu0 %v668, 1
        %v1084 = vpop.permute.xlu0 %1083
        %1085 = vrot.lane.b32.xlu0 %v670, 1
        %v1086 = vpop.permute.xlu0 %1085
        %1087 = vrot.lane.b32.xlu0 %v739, 1
        %v1088 = vpop.permute.xlu0 %1087
        %1089 = vrot.lane.b32.xlu0 %v741, 1
        %v1090 = vpop.permute.xlu0 %1089
        %1091 = vrot.lane.b32.xlu0 %v810, 1
        %v1092 = vpop.permute.xlu0 %1091
        %1093 = vrot.lane.b32.xlu0 %v812, 1
        %v1094 = vpop.permute.xlu0 %1093
        %vm1095 = vcmask 7168
        %v1096 = vsel %vm1095, %v1080, %v1082
        %v1097 = vsel %vm1095, %v1082, %v1084
        %v1098 = vsel %vm1095, %v1084, %v1086
        %v1099 = vsel %vm1095, %v1086, %v1088
        %v1100 = vsel %vm1095, %v1088, %v1090
        %v1101 = vsel %vm1095, %v1090, %v1092
        %v1102 = vsel %vm1095, %v1092, %v1094
        %v1111 = vsel %vm1095, 0.0, %v1080
        %s1112 = scalar_lea.vmem [#allocation7], 3
        %v1113 = vld [vmem:[%s1112] ss:$8 sm:$0xf]
        %v1114 = vld [vmem:[%s1112] ss:$8 sm:$0xf0]
        %v1115 = vor.u32 %v1113, %v1114
        %v1117 = vlaneseq
        %v1118 = vshrl.u32 %v1117, 7
        %v1119 = vsub.s32 0, %v1118
        %v1120 = vrot.slane %v1115, %v1119
        %v1121 = vlaneseq
        %v1122 = vshrl.u32 %v1121, 7
        %v1123 = vsub.s32 1, %v1122
        %v1124 = vrot.slane %v1115, %v1123
        %v1125 = vlaneseq
        %v1126 = vshrl.u32 %v1125, 7
        %v1127 = vsub.s32 2, %v1126
        %v1128 = vrot.slane %v1115, %v1127
        %v1129 = vlaneseq
        %v1130 = vshrl.u32 %v1129, 7
        %v1131 = vsub.s32 3, %v1130
        %v1132 = vrot.slane %v1115, %v1131
        %v1133 = vlaneseq
        %v1134 = vshrl.u32 %v1133, 7
        %v1135 = vsub.s32 4, %v1134
        %v1136 = vrot.slane %v1115, %v1135
        %v1137 = vlaneseq
        %v1138 = vshrl.u32 %v1137, 7
        %v1139 = vsub.s32 5, %v1138
        %v1140 = vrot.slane %v1115, %v1139
        %v1141 = vlaneseq
        %v1142 = vshrl.u32 %v1141, 7
        %v1143 = vsub.s32 6, %v1142
        %v1144 = vrot.slane %v1115, %v1143
        %v1145 = vlaneseq
        %v1146 = vshrl.u32 %v1145, 7
        %v1147 = vsub.s32 7, %v1146
        %v1148 = vrot.slane %v1115, %v1147
        %v1157 = vmul.f32 %v1111, %v1120
        %v1158 = vmul.f32 %v1096, %v1124
        %v1159 = vmul.f32 %v1097, %v1128
        %v1160 = vmul.f32 %v1098, %v1132
        %v1161 = vmul.f32 %v1099, %v1136
        %v1162 = vmul.f32 %v1100, %v1140
        %v1163 = vmul.f32 %v1101, %v1144
        %v1164 = vmul.f32 %v1102, %v1148
        %s1165 = scalar_lea.vmem [#allocation7], 4
        %v1166 = vld [vmem:[%s1165] ss:$8 sm:$0xf]
        %v1167 = vld [vmem:[%s1165] ss:$8 sm:$0xf0]
        %v1168 = vor.u32 %v1166, %v1167
        %v1170 = vlaneseq
        %v1171 = vshrl.u32 %v1170, 7
        %v1172 = vsub.s32 0, %v1171
        %v1173 = vrot.slane %v1168, %v1172
        %v1174 = vlaneseq
        %v1175 = vshrl.u32 %v1174, 7
        %v1176 = vsub.s32 1, %v1175
        %v1177 = vrot.slane %v1168, %v1176
        %v1178 = vlaneseq
        %v1179 = vshrl.u32 %v1178, 7
        %v1180 = vsub.s32 2, %v1179
        %v1181 = vrot.slane %v1168, %v1180
        %v1182 = vlaneseq
        %v1183 = vshrl.u32 %v1182, 7
        %v1184 = vsub.s32 3, %v1183
        %v1185 = vrot.slane %v1168, %v1184
        %v1186 = vlaneseq
        %v1187 = vshrl.u32 %v1186, 7
        %v1188 = vsub.s32 4, %v1187
        %v1189 = vrot.slane %v1168, %v1188
        %v1190 = vlaneseq
        %v1191 = vshrl.u32 %v1190, 7
        %v1192 = vsub.s32 5, %v1191
        %v1193 = vrot.slane %v1168, %v1192
        %v1194 = vlaneseq
        %v1195 = vshrl.u32 %v1194, 7
        %v1196 = vsub.s32 6, %v1195
        %v1197 = vrot.slane %v1168, %v1196
        %v1198 = vlaneseq
        %v1199 = vshrl.u32 %v1198, 7
        %v1200 = vsub.s32 7, %v1199
        %v1201 = vrot.slane %v1168, %v1200
        %v1210 = vmul.f32 %v597, %v1173
        %v1211 = vmul.f32 %v599, %v1177
        %v1212 = vmul.f32 %v668, %v1181
        %v1213 = vmul.f32 %v670, %v1185
        %v1214 = vmul.f32 %v739, %v1189
        %v1215 = vmul.f32 %v741, %v1193
        %v1216 = vmul.f32 %v810, %v1197
        %v1217 = vmul.f32 %v812, %v1201
        %1218 = vrot.lane.b32.xlu0 %v597, 127
        %v1219 = vpop.permute.xlu0 %1218
        %1220 = vrot.lane.b32.xlu0 %v599, 127
        %v1221 = vpop.permute.xlu0 %1220
        %1222 = vrot.lane.b32.xlu0 %v668, 127
        %v1223 = vpop.permute.xlu0 %1222
        %1224 = vrot.lane.b32.xlu0 %v670, 127
        %v1225 = vpop.permute.xlu0 %1224
        %1226 = vrot.lane.b32.xlu0 %v739, 127
        %v1227 = vpop.permute.xlu0 %1226
        %1228 = vrot.lane.b32.xlu0 %v741, 127
        %v1229 = vpop.permute.xlu0 %1228
        %1230 = vrot.lane.b32.xlu0 %v810, 127
        %v1231 = vpop.permute.xlu0 %1230
        %1232 = vrot.lane.b32.xlu0 %v812, 127
        %v1233 = vpop.permute.xlu0 %1232
        %vm1234 = vcmask 1039360
        %v1235 = vsel %vm1234, %v1219, %v1221
        %v1236 = vsel %vm1234, %v1221, %v1223
        %v1237 = vsel %vm1234, %v1223, %v1225
        %v1238 = vsel %vm1234, %v1225, %v1227
        %v1239 = vsel %vm1234, %v1227, %v1229
        %v1240 = vsel %vm1234, %v1229, %v1231
        %v1241 = vsel %vm1234, %v1231, %v1233
        %v1250 = vsel %vm1234, %v1233, 0.0
        %s1251 = scalar_lea.vmem [#allocation7], 5
        %v1252 = vld [vmem:[%s1251] ss:$8 sm:$0xf]
        %v1253 = vld [vmem:[%s1251] ss:$8 sm:$0xf0]
        %v1254 = vor.u32 %v1252, %v1253
        %v1256 = vlaneseq
        %v1257 = vshrl.u32 %v1256, 7
        %v1258 = vsub.s32 0, %v1257
        %v1259 = vrot.slane %v1254, %v1258
        %v1260 = vlaneseq
        %v1261 = vshrl.u32 %v1260, 7
        %v1262 = vsub.s32 1, %v1261
        %v1263 = vrot.slane %v1254, %v1262
        %v1264 = vlaneseq
        %v1265 = vshrl.u32 %v1264, 7
        %v1266 = vsub.s32 2, %v1265
        %v1267 = vrot.slane %v1254, %v1266
        %v1268 = vlaneseq
        %v1269 = vshrl.u32 %v1268, 7
        %v1270 = vsub.s32 3, %v1269
        %v1271 = vrot.slane %v1254, %v1270
        %v1272 = vlaneseq
        %v1273 = vshrl.u32 %v1272, 7
        %v1274 = vsub.s32 4, %v1273
        %v1275 = vrot.slane %v1254, %v1274
        %v1276 = vlaneseq
        %v1277 = vshrl.u32 %v1276, 7
        %v1278 = vsub.s32 5, %v1277
        %v1279 = vrot.slane %v1254, %v1278
        %v1280 = vlaneseq
        %v1281 = vshrl.u32 %v1280, 7
        %v1282 = vsub.s32 6, %v1281
        %v1283 = vrot.slane %v1254, %v1282
        %v1284 = vlaneseq
        %v1285 = vshrl.u32 %v1284, 7
        %v1286 = vsub.s32 7, %v1285
        %v1287 = vrot.slane %v1254, %v1286
        %v1296 = vmul.f32 %v1235, %v1259
        %v1297 = vmul.f32 %v1236, %v1263
        %v1298 = vmul.f32 %v1237, %v1267
        %v1299 = vmul.f32 %v1238, %v1271
        %v1300 = vmul.f32 %v1239, %v1275
        %v1301 = vmul.f32 %v1240, %v1279
        %v1302 = vmul.f32 %v1241, %v1283
        %v1303 = vmul.f32 %v1250, %v1287
        %1304 = vrot.lane.b32.xlu0 %v597, 97
        %v1305 = vpop.permute.xlu0 %1304
        %1306 = vrot.lane.b32.xlu0 %v599, 97
        %v1307 = vpop.permute.xlu0 %1306
        %1308 = vrot.lane.b32.xlu0 %v668, 97
        %v1309 = vpop.permute.xlu0 %1308
        %1310 = vrot.lane.b32.xlu0 %v670, 97
        %v1311 = vpop.permute.xlu0 %1310
        %1312 = vrot.lane.b32.xlu0 %v739, 97
        %v1313 = vpop.permute.xlu0 %1312
        %1314 = vrot.lane.b32.xlu0 %v741, 97
        %v1315 = vpop.permute.xlu0 %1314
        %1316 = vrot.lane.b32.xlu0 %v810, 97
        %v1317 = vpop.permute.xlu0 %1316
        %1318 = vrot.lane.b32.xlu0 %v812, 97
        %v1319 = vpop.permute.xlu0 %1318
        %vm1320 = vcmask 793600
        %v1321 = vsel %vm1320, %v1305, %v1307
        %v1322 = vsel %vm1320, %v1307, %v1309
        %v1323 = vsel %vm1320, %v1309, %v1311
        %v1324 = vsel %vm1320, %v1311, %v1313
        %v1325 = vsel %vm1320, %v1313, %v1315
        %v1326 = vsel %vm1320, %v1315, %v1317
        %v1327 = vsel %vm1320, %v1317, %v1319
        %v1336 = vsel %vm1320, %v1319, 0.0
        %s1337 = scalar_lea.vmem [#allocation7], 6
        %v1338 = vld [vmem:[%s1337] ss:$8 sm:$0xf]
        %v1339 = vld [vmem:[%s1337] ss:$8 sm:$0xf0]
        %v1340 = vor.u32 %v1338, %v1339
        %v1342 = vlaneseq
        %v1343 = vshrl.u32 %v1342, 7
        %v1344 = vsub.s32 0, %v1343
        %v1345 = vrot.slane %v1340, %v1344
        %v1346 = vlaneseq
        %v1347 = vshrl.u32 %v1346, 7
        %v1348 = vsub.s32 1, %v1347
        %v1349 = vrot.slane %v1340, %v1348
        %v1350 = vlaneseq
        %v1351 = vshrl.u32 %v1350, 7
        %v1352 = vsub.s32 2, %v1351
        %v1353 = vrot.slane %v1340, %v1352
        %v1354 = vlaneseq
        %v1355 = vshrl.u32 %v1354, 7
        %v1356 = vsub.s32 3, %v1355
        %v1357 = vrot.slane %v1340, %v1356
        %v1358 = vlaneseq
        %v1359 = vshrl.u32 %v1358, 7
        %v1360 = vsub.s32 4, %v1359
        %v1361 = vrot.slane %v1340, %v1360
        %v1362 = vlaneseq
        %v1363 = vshrl.u32 %v1362, 7
        %v1364 = vsub.s32 5, %v1363
        %v1365 = vrot.slane %v1340, %v1364
        %v1366 = vlaneseq
        %v1367 = vshrl.u32 %v1366, 7
        %v1368 = vsub.s32 6, %v1367
        %v1369 = vrot.slane %v1340, %v1368
        %v1370 = vlaneseq
        %v1371 = vshrl.u32 %v1370, 7
        %v1372 = vsub.s32 7, %v1371
        %v1373 = vrot.slane %v1340, %v1372
        %v1382 = vmul.f32 %v1321, %v1345
        %v1383 = vmul.f32 %v1322, %v1349
        %v1384 = vmul.f32 %v1323, %v1353
        %v1385 = vmul.f32 %v1324, %v1357
        %v1386 = vmul.f32 %v1325, %v1361
        %v1387 = vmul.f32 %v1326, %v1365
        %v1388 = vmul.f32 %v1327, %v1369
        %v1389 = vmul.f32 %v1336, %v1373
        %1390 = vrot.lane.b32.xlu0 %v597, 96
        %v1391 = vpop.permute.xlu0 %1390
        %1392 = vrot.lane.b32.xlu0 %v599, 96
        %v1393 = vpop.permute.xlu0 %1392
        %1394 = vrot.lane.b32.xlu0 %v668, 96
        %v1395 = vpop.permute.xlu0 %1394
        %1396 = vrot.lane.b32.xlu0 %v670, 96
        %v1397 = vpop.permute.xlu0 %1396
        %1398 = vrot.lane.b32.xlu0 %v739, 96
        %v1399 = vpop.permute.xlu0 %1398
        %1400 = vrot.lane.b32.xlu0 %v741, 96
        %v1401 = vpop.permute.xlu0 %1400
        %1402 = vrot.lane.b32.xlu0 %v810, 96
        %v1403 = vpop.permute.xlu0 %1402
        %1404 = vrot.lane.b32.xlu0 %v812, 96
        %v1405 = vpop.permute.xlu0 %1404
        %vm1406 = vcmask 785408
        %v1407 = vsel %vm1406, %v1391, %v1393
        %v1408 = vsel %vm1406, %v1393, %v1395
        %v1409 = vsel %vm1406, %v1395, %v1397
        %v1410 = vsel %vm1406, %v1397, %v1399
        %v1411 = vsel %vm1406, %v1399, %v1401
        %v1412 = vsel %vm1406, %v1401, %v1403
        %v1413 = vsel %vm1406, %v1403, %v1405
        %v1422 = vsel %vm1406, %v1405, 0.0
        %s1423 = scalar_lea.vmem [#allocation7], 7
        %v1424 = vld [vmem:[%s1423] ss:$8 sm:$0xf]
        %v1425 = vld [vmem:[%s1423] ss:$8 sm:$0xf0]
        %v1426 = vor.u32 %v1424, %v1425
        %v1428 = vlaneseq
        %v1429 = vshrl.u32 %v1428, 7
        %v1430 = vsub.s32 0, %v1429
        %v1431 = vrot.slane %v1426, %v1430
        %v1432 = vlaneseq
        %v1433 = vshrl.u32 %v1432, 7
        %v1434 = vsub.s32 1, %v1433
        %v1435 = vrot.slane %v1426, %v1434
        %v1436 = vlaneseq
        %v1437 = vshrl.u32 %v1436, 7
        %v1438 = vsub.s32 2, %v1437
        %v1439 = vrot.slane %v1426, %v1438
        %v1440 = vlaneseq
        %v1441 = vshrl.u32 %v1440, 7
        %v1442 = vsub.s32 3, %v1441
        %v1443 = vrot.slane %v1426, %v1442
        %v1444 = vlaneseq
        %v1445 = vshrl.u32 %v1444, 7
        %v1446 = vsub.s32 4, %v1445
        %v1447 = vrot.slane %v1426, %v1446
        %v1448 = vlaneseq
        %v1449 = vshrl.u32 %v1448, 7
        %v1450 = vsub.s32 5, %v1449
        %v1451 = vrot.slane %v1426, %v1450
        %v1452 = vlaneseq
        %v1453 = vshrl.u32 %v1452, 7
        %v1454 = vsub.s32 6, %v1453
        %v1455 = vrot.slane %v1426, %v1454
        %v1456 = vlaneseq
        %v1457 = vshrl.u32 %v1456, 7
        %v1458 = vsub.s32 7, %v1457
        %v1459 = vrot.slane %v1426, %v1458
        %v1468 = vmul.f32 %v1407, %v1431
        %v1469 = vmul.f32 %v1408, %v1435
        %v1470 = vmul.f32 %v1409, %v1439
        %v1471 = vmul.f32 %v1410, %v1443
        %v1472 = vmul.f32 %v1411, %v1447
        %v1473 = vmul.f32 %v1412, %v1451
        %v1474 = vmul.f32 %v1413, %v1455
        %v1475 = vmul.f32 %v1422, %v1459
        %1476 = vrot.lane.b32.xlu0 %v597, 95
        %v1477 = vpop.permute.xlu0 %1476
        %1478 = vrot.lane.b32.xlu0 %v599, 95
        %v1479 = vpop.permute.xlu0 %1478
        %1480 = vrot.lane.b32.xlu0 %v668, 95
        %v1481 = vpop.permute.xlu0 %1480
        %1482 = vrot.lane.b32.xlu0 %v670, 95
        %v1483 = vpop.permute.xlu0 %1482
        %1484 = vrot.lane.b32.xlu0 %v739, 95
        %v1485 = vpop.permute.xlu0 %1484
        %1486 = vrot.lane.b32.xlu0 %v741, 95
        %v1487 = vpop.permute.xlu0 %1486
        %1488 = vrot.lane.b32.xlu0 %v810, 95
        %v1489 = vpop.permute.xlu0 %1488
        %1490 = vrot.lane.b32.xlu0 %v812, 95
        %v1491 = vpop.permute.xlu0 %1490
        %vm1492 = vcmask 777216
        %v1493 = vsel %vm1492, %v1477, %v1479
        %v1494 = vsel %vm1492, %v1479, %v1481
        %v1495 = vsel %vm1492, %v1481, %v1483
        %v1496 = vsel %vm1492, %v1483, %v1485
        %v1497 = vsel %vm1492, %v1485, %v1487
        %v1498 = vsel %vm1492, %v1487, %v1489
        %v1499 = vsel %vm1492, %v1489, %v1491
        %v1508 = vsel %vm1492, %v1491, 0.0
        %s1509 = scalar_lea.vmem [#allocation7], 64
        %v1510 = vld [vmem:[%s1509] ss:$8 sm:$0xf]
        %v1511 = vld [vmem:[%s1509] ss:$8 sm:$0xf0]
        %v1512 = vor.u32 %v1510, %v1511
        %v1514 = vlaneseq
        %v1515 = vshrl.u32 %v1514, 7
        %v1516 = vsub.s32 0, %v1515
        %v1517 = vrot.slane %v1512, %v1516
        %v1518 = vlaneseq
        %v1519 = vshrl.u32 %v1518, 7
        %v1520 = vsub.s32 1, %v1519
        %v1521 = vrot.slane %v1512, %v1520
        %v1522 = vlaneseq
        %v1523 = vshrl.u32 %v1522, 7
        %v1524 = vsub.s32 2, %v1523
        %v1525 = vrot.slane %v1512, %v1524
        %v1526 = vlaneseq
        %v1527 = vshrl.u32 %v1526, 7
        %v1528 = vsub.s32 3, %v1527
        %v1529 = vrot.slane %v1512, %v1528
        %v1530 = vlaneseq
        %v1531 = vshrl.u32 %v1530, 7
        %v1532 = vsub.s32 4, %v1531
        %v1533 = vrot.slane %v1512, %v1532
        %v1534 = vlaneseq
        %v1535 = vshrl.u32 %v1534, 7
        %v1536 = vsub.s32 5, %v1535
        %v1537 = vrot.slane %v1512, %v1536
        %v1538 = vlaneseq
        %v1539 = vshrl.u32 %v1538, 7
        %v1540 = vsub.s32 6, %v1539
        %v1541 = vrot.slane %v1512, %v1540
        %v1542 = vlaneseq
        %v1543 = vshrl.u32 %v1542, 7
        %v1544 = vsub.s32 7, %v1543
        %v1545 = vrot.slane %v1512, %v1544
        %v1554 = vmul.f32 %v1493, %v1517
        %v1555 = vmul.f32 %v1494, %v1521
        %v1556 = vmul.f32 %v1495, %v1525
        %v1557 = vmul.f32 %v1496, %v1529
        %v1558 = vmul.f32 %v1497, %v1533
        %v1559 = vmul.f32 %v1498, %v1537
        %v1560 = vmul.f32 %v1499, %v1541
        %v1561 = vmul.f32 %v1508, %v1545
        %v1570 = vrot.slane %v985, 4
        %v1571 = vrot.slane %v986, 4
        %v1572 = vrot.slane %v987, 4
        %v1573 = vrot.slane %v988, 4
        %v1574 = vrot.slane %v989, 4
        %v1575 = vrot.slane %v990, 4
        %v1576 = vrot.slane %v991, 4
        %v1577 = vrot.slane %v992, 4
        %v1594 = vrot.slane %v1157, 4
        %v1595 = vrot.slane %v1158, 4
        %v1596 = vrot.slane %v1159, 4
        %v1597 = vrot.slane %v1160, 4
        %v1598 = vrot.slane %v1161, 4
        %v1599 = vrot.slane %v1162, 4
        %v1600 = vrot.slane %v1163, 4
        %v1601 = vrot.slane %v1164, 4
        %v1618 = vrot.slane %v1296, 4
        %v1619 = vrot.slane %v1297, 4
        %v1620 = vrot.slane %v1298, 4
        %v1621 = vrot.slane %v1299, 4
        %v1622 = vrot.slane %v1300, 4
        %v1623 = vrot.slane %v1301, 4
        %v1624 = vrot.slane %v1302, 4
        %v1625 = vrot.slane %v1303, 4
        %v1642 = vrot.slane %v1468, 4
        %v1643 = vrot.slane %v1469, 4
        %v1644 = vrot.slane %v1470, 4
        %v1645 = vrot.slane %v1471, 4
        %v1646 = vrot.slane %v1472, 4
        %v1647 = vrot.slane %v1473, 4
        %v1648 = vrot.slane %v1474, 4
        %v1649 = vrot.slane %v1475, 4
        %vm1658 = vcmask 1043456
        %v1659 = vsel %vm1658, %v899, %v1570
        %v1660 = vsel %vm1658, %v900, %v1571
        %v1661 = vsel %vm1658, %v901, %v1572
        %v1662 = vsel %vm1658, %v902, %v1573
        %v1663 = vsel %vm1658, %v903, %v1574
        %v1664 = vsel %vm1658, %v904, %v1575
        %v1665 = vsel %vm1658, %v905, %v1576
        %v1666 = vsel %vm1658, %v906, %v1577
        %v1667 = vsel %vm1658, %v1071, %v1594
        %v1668 = vsel %vm1658, %v1072, %v1595
        %v1669 = vsel %vm1658, %v1073, %v1596
        %v1670 = vsel %vm1658, %v1074, %v1597
        %v1671 = vsel %vm1658, %v1075, %v1598
        %v1672 = vsel %vm1658, %v1076, %v1599
        %v1673 = vsel %vm1658, %v1077, %v1600
        %v1674 = vsel %vm1658, %v1078, %v1601
        %v1675 = vsel %vm1658, %v1210, %v1618
        %v1676 = vsel %vm1658, %v1211, %v1619
        %v1677 = vsel %vm1658, %v1212, %v1620
        %v1678 = vsel %vm1658, %v1213, %v1621
        %v1679 = vsel %vm1658, %v1214, %v1622
        %v1680 = vsel %vm1658, %v1215, %v1623
        %v1681 = vsel %vm1658, %v1216, %v1624
        %v1682 = vsel %vm1658, %v1217, %v1625
        %v1683 = vsel %vm1658, %v1382, %v1642
        %v1684 = vsel %vm1658, %v1383, %v1643
        %v1685 = vsel %vm1658, %v1384, %v1644
        %v1686 = vsel %vm1658, %v1385, %v1645
        %v1687 = vsel %vm1658, %v1386, %v1646
        %v1688 = vsel %vm1658, %v1387, %v1647
        %v1689 = vsel %vm1658, %v1388, %v1648
        %v1690 = vsel %vm1658, %v1389, %v1649
        %v1691 = vld [vmem:[%s2] sm:$0xff]
        %v1692 = vld [vmem:[%s3] sm:$0xff]
        %1694 = vset.pattern.permute.xlu0 0
        %1695 = vperm.xlu0 %1694, %v1692
        %v1696 = vpop.permute.xlu0 %1695
        %vm1698 = vcmask 293888
        %v1700 = vsel %vm1698, %v1691, 0
        %v1703 = vsel %vm1658, %v1554, 0
        %v1706 = vsel %vm1658, %v1555, 0
        %v1709 = vsel %vm1658, %v1556, 0
        %v1712 = vsel %vm1658, %v1557, 0
        %v1715 = vsel %vm1658, %v1558, 0
        %v1718 = vsel %vm1658, %v1559, 0
        %v1721 = vsel %vm1658, %v1560, 0
        %v1724 = vsel %vm1658, %v1561, 0
        %1726 = vmatprep.subr.mxu0 0.0
        %1727 = vmatpush1.msra.mxu0 0.0
        %1728 = vmatprep.subr.mxu0 0.0
        %1729 = vmatpush1.msra.mxu0 0.0
        %1730 = vmatprep.subr.mxu0 0.0
        %1731 = vmatpush1.msra.mxu0 0.0
        %1732 = vmatprep.subr.mxu0 0.0
        %1733 = vmatpush1.msra.mxu0 0.0
        %1734 = vmatprep.subr.mxu0 0.0
        %1735 = vmatpush1.msra.mxu0 0.0
        %1736 = vmatprep.subr.mxu0 0.0
        %1737 = vmatpush1.msra.mxu0 0.0
        %1738 = vmatprep.subr.mxu0 0.0
        %1739 = vmatpush1.msra.mxu0 0.0
        %1740 = vmatprep.subr.mxu0 0.0
        %1741 = vmatpush1.msra.mxu0 0.0
        %1742 = vmatprep.subr.mxu0 0.0
        %1743 = vmatpush1.msra.mxu0 0.0
        %1744 = vmatprep.subr.mxu0 0.0
        %1745 = vmatpush1.msra.mxu0 0.0
        %1746 = vmatprep.subr.mxu0 0.0
        %1747 = vmatpush1.msra.mxu0 0.0
        %1748 = vmatprep.subr.mxu0 %v1706
        %1749 = vmatpush1.msra.mxu0 %v1703
        %1750 = vmatprep.subr.mxu0 %v1684
        %1751 = vmatpush1.msra.mxu0 %v1683
        %1752 = vmatprep.subr.mxu0 %v1676
        %1753 = vmatpush1.msra.mxu0 %v1675
        %1754 = vmatprep.subr.mxu0 %v1668
        %1755 = vmatpush1.msra.mxu0 %v1667
        %1756 = vmatprep.subr.mxu0 %v1660
        %1757 = vmatpush1.msra.mxu0 %v1659
        %1758 = vmatprep.subr.mxu0 0.0
        %1759 = vmatpush2.msra.mxu0 0.0
        %1760 = vmatprep.subr.mxu0 0.0
        %1761 = vmatpush2.msra.mxu0 0.0
        %1762 = vmatprep.subr.mxu0 0.0
        %1763 = vmatpush2.msra.mxu0 0.0
        %1764 = vmatprep.subr.mxu0 0.0
        %1765 = vmatpush2.msra.mxu0 0.0
        %1766 = vmatprep.subr.mxu0 0.0
        %1767 = vmatpush2.msra.mxu0 0.0
        %1768 = vmatprep.subr.mxu0 0.0
        %1769 = vmatpush2.msra.mxu0 0.0
        %1770 = vmatprep.subr.mxu0 0.0
        %1771 = vmatpush2.msra.mxu0 0.0
        %1772 = vmatprep.subr.mxu0 0.0
        %1773 = vmatpush2.msra.mxu0 0.0
        %1774 = vmatprep.subr.mxu0 0.0
        %1775 = vmatpush2.msra.mxu0 0.0
        %1776 = vmatprep.subr.mxu0 0.0
        %1777 = vmatpush2.msra.mxu0 0.0
        %1778 = vmatprep.subr.mxu0 0.0
        %1779 = vmatpush2.msra.mxu0 0.0
        %1780 = vmatprep.subr.mxu0 0.0
        %1781 = vmatpush2.msra.mxu0 0.0
        %1782 = vmatprep.subr.mxu0 0.0
        %1783 = vmatpush2.msra.mxu0 0.0
        %1784 = vmatprep.subr.mxu0 0.0
        %1785 = vmatpush2.msra.mxu0 0.0
        %1786 = vmatprep.subr.mxu0 0.0
        %1787 = vmatpush2.msra.mxu0 0.0
        %1788 = vmatprep.subr.mxu0 0.0
        %1789 = vmatpush2.msra.mxu0 0.0
        %1790 = vmatprep.mubr.f32.mxu0 0.0
        %1791 = vmatmul.mubr.f32.gmra.mxu0 %v1700
        %v1792 = vpop.f32.mrf.mxu0
        %v1793 = vadd.f32 %v1696, %v1792
        %v1794 = vpop.f32.mrf.mxu0
        %v1795 = vadd.f32 %v1696, %v1794
        %1796 = vdwg.mxu0
        %1797 = vmatprep.subr.mxu0 0.0
        %1798 = vmatpush1.msra.mxu0 0.0
        %1799 = vmatprep.subr.mxu0 0.0
        %1800 = vmatpush1.msra.mxu0 0.0
        %1801 = vmatprep.subr.mxu0 0.0
        %1802 = vmatpush1.msra.mxu0 0.0
        %1803 = vmatprep.subr.mxu0 0.0
        %1804 = vmatpush1.msra.mxu0 0.0
        %1805 = vmatprep.subr.mxu0 0.0
        %1806 = vmatpush1.msra.mxu0 0.0
        %1807 = vmatprep.subr.mxu0 0.0
        %1808 = vmatpush1.msra.mxu0 0.0
        %1809 = vmatprep.subr.mxu0 0.0
        %1810 = vmatpush1.msra.mxu0 0.0
        %1811 = vmatprep.subr.mxu0 0.0
        %1812 = vmatpush1.msra.mxu0 0.0
        %1813 = vmatprep.subr.mxu0 0.0
        %1814 = vmatpush1.msra.mxu0 0.0
        %1815 = vmatprep.subr.mxu0 0.0
        %1816 = vmatpush1.msra.mxu0 0.0
        %1817 = vmatprep.subr.mxu0 0.0
        %1818 = vmatpush1.msra.mxu0 0.0
        %1819 = vmatprep.subr.mxu0 %v1712
        %1820 = vmatpush1.msra.mxu0 %v1709
        %1821 = vmatprep.subr.mxu0 %v1686
        %1822 = vmatpush1.msra.mxu0 %v1685
        %1823 = vmatprep.subr.mxu0 %v1678
        %1824 = vmatpush1.msra.mxu0 %v1677
        %1825 = vmatprep.subr.mxu0 %v1670
        %1826 = vmatpush1.msra.mxu0 %v1669
        %1827 = vmatprep.subr.mxu0 %v1662
        %1828 = vmatpush1.msra.mxu0 %v1661
        %1829 = vmatprep.subr.mxu0 0.0
        %1830 = vmatpush2.msra.mxu0 0.0
        %1831 = vmatprep.subr.mxu0 0.0
        %1832 = vmatpush2.msra.mxu0 0.0
        %1833 = vmatprep.subr.mxu0 0.0
        %1834 = vmatpush2.msra.mxu0 0.0
        %1835 = vmatprep.subr.mxu0 0.0
        %1836 = vmatpush2.msra.mxu0 0.0
        %1837 = vmatprep.subr.mxu0 0.0
        %1838 = vmatpush2.msra.mxu0 0.0
        %1839 = vmatprep.subr.mxu0 0.0
        %1840 = vmatpush2.msra.mxu0 0.0
        %1841 = vmatprep.subr.mxu0 0.0
        %1842 = vmatpush2.msra.mxu0 0.0
        %1843 = vmatprep.subr.mxu0 0.0
        %1844 = vmatpush2.msra.mxu0 0.0
        %1845 = vmatprep.subr.mxu0 0.0
        %1846 = vmatpush2.msra.mxu0 0.0
        %1847 = vmatprep.subr.mxu0 0.0
        %1848 = vmatpush2.msra.mxu0 0.0
        %1849 = vmatprep.subr.mxu0 0.0
        %1850 = vmatpush2.msra.mxu0 0.0
        %1851 = vmatprep.subr.mxu0 0.0
        %1852 = vmatpush2.msra.mxu0 0.0
        %1853 = vmatprep.subr.mxu0 0.0
        %1854 = vmatpush2.msra.mxu0 0.0
        %1855 = vmatprep.subr.mxu0 0.0
        %1856 = vmatpush2.msra.mxu0 0.0
        %1857 = vmatprep.subr.mxu0 0.0
        %1858 = vmatpush2.msra.mxu0 0.0
        %1859 = vmatprep.subr.mxu0 0.0
        %1860 = vmatpush2.msra.mxu0 0.0
        %1861 = vmatprep.mubr.f32.mxu0 0.0
        %1862 = vmatmul.mubr.f32.gmra.mxu0 %v1700
        %v1863 = vpop.f32.mrf.mxu0
        %v1864 = vadd.f32 %v1696, %v1863
        %v1865 = vpop.f32.mrf.mxu0
        %v1866 = vadd.f32 %v1696, %v1865
        %1867 = vdwg.mxu0
        %1868 = vmatprep.subr.mxu0 0.0
        %1869 = vmatpush1.msra.mxu0 0.0
        %1870 = vmatprep.subr.mxu0 0.0
        %1871 = vmatpush1.msra.mxu0 0.0
        %1872 = vmatprep.subr.mxu0 0.0
        %1873 = vmatpush1.msra.mxu0 0.0
        %1874 = vmatprep.subr.mxu0 0.0
        %1875 = vmatpush1.msra.mxu0 0.0
        %1876 = vmatprep.subr.mxu0 0.0
        %1877 = vmatpush1.msra.mxu0 0.0
        %1878 = vmatprep.subr.mxu0 0.0
        %1879 = vmatpush1.msra.mxu0 0.0
        %1880 = vmatprep.subr.mxu0 0.0
        %1881 = vmatpush1.msra.mxu0 0.0
        %1882 = vmatprep.subr.mxu0 0.0
        %1883 = vmatpush1.msra.mxu0 0.0
        %1884 = vmatprep.subr.mxu0 0.0
        %1885 = vmatpush1.msra.mxu0 0.0
        %1886 = vmatprep.subr.mxu0 0.0
        %1887 = vmatpush1.msra.mxu0 0.0
        %1888 = vmatprep.subr.mxu0 0.0
        %1889 = vmatpush1.msra.mxu0 0.0
        %1890 = vmatprep.subr.mxu0 %v1718
        %1891 = vmatpush1.msra.mxu0 %v1715
        %1892 = vmatprep.subr.mxu0 %v1688
        %1893 = vmatpush1.msra.mxu0 %v1687
        %1894 = vmatprep.subr.mxu0 %v1680
        %1895 = vmatpush1.msra.mxu0 %v1679
        %1896 = vmatprep.subr.mxu0 %v1672
        %1897 = vmatpush1.msra.mxu0 %v1671
        %1898 = vmatprep.subr.mxu0 %v1664
        %1899 = vmatpush1.msra.mxu0 %v1663
        %1900 = vmatprep.subr.mxu0 0.0
        %1901 = vmatpush2.msra.mxu0 0.0
        %1902 = vmatprep.subr.mxu0 0.0
        %1903 = vmatpush2.msra.mxu0 0.0
        %1904 = vmatprep.subr.mxu0 0.0
        %1905 = vmatpush2.msra.mxu0 0.0
        %1906 = vmatprep.subr.mxu0 0.0
        %1907 = vmatpush2.msra.mxu0 0.0
        %1908 = vmatprep.subr.mxu0 0.0
        %1909 = vmatpush2.msra.mxu0 0.0
        %1910 = vmatprep.subr.mxu0 0.0
        %1911 = vmatpush2.msra.mxu0 0.0
        %1912 = vmatprep.subr.mxu0 0.0
        %1913 = vmatpush2.msra.mxu0 0.0
        %1914 = vmatprep.subr.mxu0 0.0
        %1915 = vmatpush2.msra.mxu0 0.0
        %1916 = vmatprep.subr.mxu0 0.0
        %1917 = vmatpush2.msra.mxu0 0.0
        %1918 = vmatprep.subr.mxu0 0.0
        %1919 = vmatpush2.msra.mxu0 0.0
        %1920 = vmatprep.subr.mxu0 0.0
        %1921 = vmatpush2.msra.mxu0 0.0
        %1922 = vmatprep.subr.mxu0 0.0
        %1923 = vmatpush2.msra.mxu0 0.0
        %1924 = vmatprep.subr.mxu0 0.0
        %1925 = vmatpush2.msra.mxu0 0.0
        %1926 = vmatprep.subr.mxu0 0.0
        %1927 = vmatpush2.msra.mxu0 0.0
        %1928 = vmatprep.subr.mxu0 0.0
        %1929 = vmatpush2.msra.mxu0 0.0
        %1930 = vmatprep.subr.mxu0 0.0
        %1931 = vmatpush2.msra.mxu0 0.0
        %1932 = vmatprep.mubr.f32.mxu0 0.0
        %1933 = vmatmul.mubr.f32.gmra.mxu0 %v1700
        %v1934 = vpop.f32.mrf.mxu0
        %v1935 = vadd.f32 %v1696, %v1934
        %v1936 = vpop.f32.mrf.mxu0
        %v1937 = vadd.f32 %v1696, %v1936
        %1938 = vdwg.mxu0
        %1939 = vmatprep.subr.mxu0 0.0
        %1940 = vmatpush1.msra.mxu0 0.0
        %1941 = vmatprep.subr.mxu0 0.0
        %1942 = vmatpush1.msra.mxu0 0.0
        %1943 = vmatprep.subr.mxu0 0.0
        %1944 = vmatpush1.msra.mxu0 0.0
        %1945 = vmatprep.subr.mxu0 0.0
        %1946 = vmatpush1.msra.mxu0 0.0
        %1947 = vmatprep.subr.mxu0 0.0
        %1948 = vmatpush1.msra.mxu0 0.0
        %1949 = vmatprep.subr.mxu0 0.0
        %1950 = vmatpush1.msra.mxu0 0.0
        %1951 = vmatprep.subr.mxu0 0.0
        %1952 = vmatpush1.msra.mxu0 0.0
        %1953 = vmatprep.subr.mxu0 0.0
        %1954 = vmatpush1.msra.mxu0 0.0
        %1955 = vmatprep.subr.mxu0 0.0
        %1956 = vmatpush1.msra.mxu0 0.0
        %1957 = vmatprep.subr.mxu0 0.0
        %1958 = vmatpush1.msra.mxu0 0.0
        %1959 = vmatprep.subr.mxu0 0.0
        %1960 = vmatpush1.msra.mxu0 0.0
        %1961 = vmatprep.subr.mxu0 %v1724
        %1962 = vmatpush1.msra.mxu0 %v1721
        %1963 = vmatprep.subr.mxu0 %v1690
        %1964 = vmatpush1.msra.mxu0 %v1689
        %1965 = vmatprep.subr.mxu0 %v1682
        %1966 = vmatpush1.msra.mxu0 %v1681
        %1967 = vmatprep.subr.mxu0 %v1674
        %1968 = vmatpush1.msra.mxu0 %v1673
        %1969 = vmatprep.subr.mxu0 %v1666
        %1970 = vmatpush1.msra.mxu0 %v1665
        %1971 = vmatprep.subr.mxu0 0.0
        %1972 = vmatpush2.msra.mxu0 0.0
        %1973 = vmatprep.subr.mxu0 0.0
        %1974 = vmatpush2.msra.mxu0 0.0
        %1975 = vmatprep.subr.mxu0 0.0
        %1976 = vmatpush2.msra.mxu0 0.0
        %1977 = vmatprep.subr.mxu0 0.0
        %1978 = vmatpush2.msra.mxu0 0.0
        %1979 = vmatprep.subr.mxu0 0.0
        %1980 = vmatpush2.msra.mxu0 0.0
        %1981 = vmatprep.subr.mxu0 0.0
        %1982 = vmatpush2.msra.mxu0 0.0
        %1983 = vmatprep.subr.mxu0 0.0
        %1984 = vmatpush2.msra.mxu0 0.0
        %1985 = vmatprep.subr.mxu0 0.0
        %1986 = vmatpush2.msra.mxu0 0.0
        %1987 = vmatprep.subr.mxu0 0.0
        %1988 = vmatpush2.msra.mxu0 0.0
        %1989 = vmatprep.subr.mxu0 0.0
        %1990 = vmatpush2.msra.mxu0 0.0
        %1991 = vmatprep.subr.mxu0 0.0
        %1992 = vmatpush2.msra.mxu0 0.0
        %1993 = vmatprep.subr.mxu0 0.0
        %1994 = vmatpush2.msra.mxu0 0.0
        %1995 = vmatprep.subr.mxu0 0.0
        %1996 = vmatpush2.msra.mxu0 0.0
        %1997 = vmatprep.subr.mxu0 0.0
        %1998 = vmatpush2.msra.mxu0 0.0
        %1999 = vmatprep.subr.mxu0 0.0
        %2000 = vmatpush2.msra.mxu0 0.0
        %2001 = vmatprep.subr.mxu0 0.0
        %2002 = vmatpush2.msra.mxu0 0.0
        %2003 = vmatprep.mubr.f32.mxu0 0.0
        %2004 = vmatmul.mubr.f32.gmra.mxu0 %v1700
        %v2005 = vpop.f32.mrf.mxu0
        %v2006 = vadd.f32 %v1696, %v2005
        %v2007 = vpop.f32.mrf.mxu0
        %v2008 = vadd.f32 %v1696, %v2007
        %2009 = vdwg.mxu0
        %2010 = vst [vmem:[%s269] sm:$0xff] %v1793
        %2011 = vst [vmem:[%s269 + $0x8] sm:$0xff] %v1795
        %2012 = vst [vmem:[%s269 + $0x10] sm:$0xff] %v1864
        %2013 = vst [vmem:[%s269 + $0x18] sm:$0xff] %v1866
        %2014 = vst [vmem:[%s269 + $0x20] sm:$0xff] %v1935
        %2015 = vst [vmem:[%s269 + $0x28] sm:$0xff] %v1937
        %2016 = vst [vmem:[%s269 + $0x30] sm:$0xff] %v2006
        %2017 = vst [vmem:[%s269 + $0x38] sm:$0xff] %v2008
        %s2018 = sand.u32 %s141, 1
        %s2019 = scalar_lea.sflag [#allocation4], %s2018
        %s2020 = sand.u32 %s141, 1
        %s2021 = smul.addr %s2020, 64
        %s2022 = scalar_lea.vmem [#allocation8], %s2021
        // Predicated region
        $region53: #{tpu_custom_call.1} parent=39 // pred_check
          %p2023 = pneg %p151
        $region54: #{tpu_custom_call.1} parent=39 // pred_check_branch
          %2025 = sbr.rel (%p2023) target = $region56
        $region55: #{tpu_custom_call.1} parent=39 // pred_region
          %s2027 = ssub.s32 1024, 1024
          %2028 = vsyncadd %s2019, %s2027
          %s2029 = smul.addr %s23, 8
          %s2030 = smul.addr %s2029, 128
          %s2031 = scalar_lea.hbm %s5, %s2030
          %s2033 = sshll.u32 %s2022, 4
          %s2034 = int_to_ptr.vmem [resolvable:$true] %s2033
          %2036 = dma.vmem_to_hbm [thread:$0]  %s2034, 1024, %s2031, %s2019
        $region56: #{tpu_custom_call.1} parent=39 // pred_fallthru
          _
      $region40: #{tpu_custom_call.1} parent=5 // pred_fallthru
        _
      %p2037 = scmp.le.s32.totalorder 2, %s18
      // Predicated region
      $region57: #{tpu_custom_call.1} parent=5 // pred_check
        %p2038 = pneg %p2037
      $region58: #{tpu_custom_call.1} parent=5 // pred_check_branch
        %2040 = sbr.rel (%p2038) target = $region60
      $region59: #{tpu_custom_call.1} parent=5 // pred_region
        %s2041 = ssub.s32 %s18, 2
        // Predicated region
        $region61: #{tpu_custom_call.1} parent=59 // pred_check
          %p2042 = pneg %p157
        $region62: #{tpu_custom_call.1} parent=59 // pred_check_branch
          %2044 = sbr.rel (%p2042) target = $region64
        $region63: #{tpu_custom_call.1} parent=59 // pred_region
          %s2045 = sand.u32 %s142, 1
          %s2046 = scalar_lea.sflag [#allocation4], %s2045
          %s2047 = sand.u32 %s142, 1
          %s2048 = smul.addr %s2047, 64
          %s2049 = scalar_lea.vmem [#allocation8], %s2048
          %2050 = dma.done %s2046, 1024
        $region64: #{tpu_custom_call.1} parent=59 // pred_fallthru
          _
      $region60: #{tpu_custom_call.1} parent=5 // pred_fallthru
        _
    $region6: #{tpu_custom_call.1} parent=1 // loop_footer
      %s22 = sadd.s32 1, %s18
    $region7: #{tpu_custom_call.1} parent=1 // loop_footer_branch
      %17 = sbr.rel target = $region3
    $region8: #{tpu_custom_call.1} parent=1 // loop_exit
      _
    %2051 = vsyncpa [#allocation3], 1
    %s2052 = scalar_lea.sflag [#allocation3], 1
    %2053 = vsyncpa %s2052, 1
    %2054 = vsyncpa [#allocation6], 1
    %2055 = vsyncpa [#allocation4], 1
    %s2056 = scalar_lea.sflag [#allocation4], 1
    %2057 = vsyncpa %s2056, 1

</llo_original>
